<compile_context>
chip_gen: v6e
topology: v6e:2x2x1
jax: 0.10.0
libtpu: 0.0.40
codegen_flags: <defaults>
</compile_context>

<pallas_src>
import functools

import jax
import jax.numpy as jnp
from jax.experimental import pallas as pl
from jax.experimental.pallas import tpu as pltpu

BN_EPS = 1e-5
NEG_SLOPE = 0.1
LANE = 128
FUSE_CIN_MAX = 128   # Cin below this: width-im2col (contraction K*Cin); else direct taps


def _round_up(x, m):
    return ((x + m - 1) // m) * m


def _device_kind():
    try:
        return jax.devices()[0].device_kind.lower()
    except Exception:
        return ""


def _pick_tco(cpad):
    """Cout tile: fill the 256-wide MXU on v6e/v7x, 128 on v5e/unknown."""
    kind = _device_kind()
    wide_mxu = ("v6" in kind) or ("v7" in kind)
    if wide_mxu and cpad % 256 == 0:
        return 256
    return 128


def _pick_vmem_limit():
    kind = _device_kind()
    if "v6" in kind:
        return 96 * 1024 * 1024      # v6e: 128 MiB physical VMEM
    return 48 * 1024 * 1024          # safe on v7x (64 MiB physical) and v5e


def _pick_rt(h, wq, tco):
    """Rows per chunk: target ~2 MiB for the f32 (RT*Wq, TCO) accumulator tile.

    Small enough to double-buffer comfortably inside a 48 MiB VMEM budget on
    every generation, big enough at real YOLO resolutions to amortize the
    ~0.35us per-grid-step overhead and keep stores lane+sublane dense.
    """
    max_flat = (2 * 1024 * 1024) // (4 * tco)
    rt = max(1, min(h, max_flat // wq))
    if rt >= 8:
        rt = (rt // 8) * 8
    return rt


def _make_conv_stats_kernel(K, RT, Wq, fused, with_mask):
    """Pass 1: conv (no bias) + per-channel sum / sum-of-squares partials.

    refs (in order):
      x_ref:    (1, 1, RT+K-1, Wx, Ctap) bf16   row chunk incl. K-1 halo
      w_ref:    (n_tap, Ctap, TCO)       bf16   fused conv weights (one Cout tile)
      [mask_ref:(1, RT*Wq, 1)            f32    1.0 on valid (h<H, w<W) positions]
      conv_ref: (1, 1, RT*Wq, TCO)       bf16   pre-BN conv tile
      sum_ref:  (1, 1, 1, TCO)           f32    per-channel sum partial
      ssq_ref:  (1, 1, 1, TCO)           f32    per-channel sum-of-squares partial
      acc_ref:  (RT*Wq, TCO)             f32    VMEM scratch accumulator
    """
    flat = RT * Wq
    if fused:
        taps = [(kh, 0) for kh in range(K)]                       # width pre-fused
    else:
        taps = [(kh, kw) for kh in range(K) for kw in range(K)]   # direct K*K taps

    def kernel(*refs):
        if with_mask:
            x_ref, w_ref, mask_ref, conv_ref, sum_ref, ssq_ref, acc_ref = refs
        else:
            x_ref, w_ref, conv_ref, sum_ref, ssq_ref, acc_ref = refs
            mask_ref = None

        for t, (kh, kw) in enumerate(taps):
            if fused:
                patch = x_ref[0, 0, kh:kh + RT]                  # (RT, Wq, K*Cin)
            else:
                patch = x_ref[0, 0, kh:kh + RT, kw:kw + Wq, :]   # (RT, Wq, Cin)
            patch = patch.reshape(flat, patch.shape[-1])
            contrib = jnp.dot(patch, w_ref[t],
                              preferred_element_type=jnp.float32)
            if t == 0:
                acc_ref[...] = contrib
            else:
                acc_ref[...] += contrib

        acc = acc_ref[...]
        conv_ref[0, 0] = acc.astype(conv_ref.dtype)              # bf16 intermediate

        if mask_ref is not None:
            # Exclude rows/cols that only exist because of the 8-aligned width /
            # row-tile padding from the BN statistics (their conv values are
            # edge junk; they are sliced off in the wrapper after pass 2).
            acc_m = acc * mask_ref[0]                            # (flat, TCO)
            sum_ref[0, 0] = jnp.sum(acc_m, axis=0, keepdims=True)
            ssq_ref[0, 0] = jnp.sum(acc_m * acc, axis=0, keepdims=True)
        else:
            sum_ref[0, 0] = jnp.sum(acc, axis=0, keepdims=True)
            ssq_ref[0, 0] = jnp.sum(acc * acc, axis=0, keepdims=True)

    return kernel


def bn_act_kernel(conv_ref, scale_ref, shift_ref, o_ref):
    """Pass 2: folded BatchNorm (y = conv*scale + shift) + LeakyReLU(0.1)."""
    y = conv_ref[0, 0].astype(jnp.float32) * scale_ref[...] + shift_ref[...]
    o_ref[0, 0] = jnp.where(y >= 0, y, NEG_SLOPE * y).astype(o_ref.dtype)


@functools.partial(jax.jit, static_argnames=("row_tile",))
def yolo_block(x_nchw, w_oihw, bias, gamma, beta, *, row_tile=None):
    """YoloBlock forward. x_nchw: (N, Cin, H, W) -> (N, Cout, H, W)."""
    del bias  # The conv bias cancels exactly inside BatchNorm:
              # (conv+b) - mean(conv+b) = conv - mean(conv).
    N, Cin, H, W = x_nchw.shape
    Cout, _, K, _ = w_oihw.shape

    Cpad = _round_up(Cout, LANE)
    TCO = _pick_tco(Cpad)
    n_co = Cpad // TCO

    Wq = _round_up(W, 8)                       # layout-preserving (RT,Wq)->(RT*Wq) reshape
    RT = row_tile if row_tile is not None else _pick_rt(H, Wq, TCO)
    n_rt = -(-H // RT)
    Hq = n_rt * RT
    flat = RT * Wq
    need_mask = (Hq != H) or (Wq != W)

    fused = Cin < FUSE_CIN_MAX

    # PyTorch 'same' padding (stride 1): left = (K-1)//2, right = K-1-left.
    pad_lo = (K - 1) // 2
    pad_hi = (K - 1) - pad_lo

    # Padded NHWC input in bf16.  Extra zero rows/cols on bottom/right make
    # every row chunk and the 8-aligned width full; the padded output positions
    # are excluded from the BN statistics (mask) and sliced off at the end.
    x_nhwc = jnp.transpose(x_nchw, (0, 2, 3, 1)).astype(jnp.bfloat16)
    xp = jnp.pad(x_nhwc, ((0, 0),
                          (pad_lo, pad_hi + (Hq - H)),
                          (pad_lo, pad_hi + (Wq - W)),
                          (0, 0)))

    w_khwio = jnp.transpose(w_oihw, (2, 3, 1, 0))        # (K, K, Cin, Cout)
    if fused:
        # Width-im2col: fuse the K width taps along channels so each MXU matmul
        # has contraction K*Cin (keeps the MXU fed for small-Cin stem layers).
        taps = [xp[:, :, kw:kw + Wq, :] for kw in range(K)]
        xsrc = jnp.stack(taps, axis=3).reshape(N, Hq + K - 1, Wq, K * Cin)
        w_f = w_khwio.reshape(K, K * Cin, Cout)
    else:
        # Large Cin: no im2col (3x input-read amplification); K*K taps in-kernel.
        xsrc = xp                                        # (N, Hq+K-1, Wq+K-1, Cin)
        w_f = w_khwio.reshape(K * K, Cin, Cout)
    w_f = jnp.pad(w_f, ((0, 0), (0, 0), (0, Cpad - Cout))).astype(jnp.bfloat16)

    g2 = jnp.pad(gamma, (0, Cpad - Cout)).reshape(1, Cpad).astype(jnp.float32)
    be2 = jnp.pad(beta, (0, Cpad - Cout)).reshape(1, Cpad).astype(jnp.float32)

    # Row chunks with a K-1 halo: pass 1 only ever holds (RT+K-1) rows in VMEM.
    # TODO(synk): express the halo via element-offset index maps to avoid the
    # small ((K-1)/RT) HBM duplication of this wrapper-side chunking.
    x_blk = jnp.stack([xsrc[:, r * RT:r * RT + RT + K - 1] for r in range(n_rt)],
                      axis=1)                            # (N, n_rt, RT+K-1, Wx, Ctap)
    Wx, Ctap = x_blk.shape[3], x_blk.shape[4]
    n_tap = w_f.shape[0]

    cparams = pltpu.CompilerParams(
        dimension_semantics=("parallel", "parallel", "parallel"),
        vmem_limit_bytes=_pick_vmem_limit())

    # ---- pass 1: conv + per-channel sum / sumsq partials ---------------------
    in_specs = [
        pl.BlockSpec((1, 1, RT + K - 1, Wx, Ctap), lambda n, r, j: (n, r, 0, 0, 0)),
        pl.BlockSpec((n_tap, Ctap, TCO), lambda n, r, j: (0, 0, j)),
    ]
    args = [x_blk, w_f]
    if need_mask:
        row_valid = jnp.arange(Hq) < H
        col_valid = jnp.arange(Wq) < W
        mask = (row_valid[:, None] & col_valid[None, :]).astype(jnp.float32)
        args.append(mask.reshape(n_rt, flat, 1))
        in_specs.append(pl.BlockSpec((1, flat, 1), lambda n, r, j: (r, 0, 0)))

    conv_kernel = _make_conv_stats_kernel(K, RT, Wq, fused, need_mask)
    conv_out, sums, ssqs = pl.pallas_call(
        conv_kernel,
        grid=(N, n_rt, n_co),
        in_specs=in_specs,
        out_specs=(
            pl.BlockSpec((1, 1, flat, TCO), lambda n, r, j: (n, r, 0, j)),
            pl.BlockSpec((1, 1, 1, TCO), lambda n, r, j: (n, r, 0, j)),
            pl.BlockSpec((1, 1, 1, TCO), lambda n, r, j: (n, r, 0, j)),
        ),
        out_shape=(
            jax.ShapeDtypeStruct((N, n_rt, flat, Cpad), jnp.bfloat16),
            jax.ShapeDtypeStruct((N, n_rt, 1, Cpad), jnp.float32),
            jax.ShapeDtypeStruct((N, n_rt, 1, Cpad), jnp.float32),
        ),
        scratch_shapes=[pltpu.VMEM((flat, TCO), jnp.float32)],
        compiler_params=cparams,
    )(*args)

    # ---- tiny BN statistics + folding (plain JAX on (1, Cpad) vectors) -------
    cnt = jnp.float32(N * H * W)
    mean = jnp.sum(sums, axis=(0, 1)) / cnt              # (1, Cpad), bias-free conv mean
    ex2 = jnp.sum(ssqs, axis=(0, 1)) / cnt
    var = jnp.maximum(ex2 - mean * mean, 0.0)            # biased variance (bias-invariant)
    # TODO(synk): for very large N*H*W switch to a shifted / Welford-style merge
    # of per-tile partials; E[x^2]-E[x]^2 in f32 can cancel when |mean| >> std.
    inv = jax.lax.rsqrt(var + BN_EPS)
    scale = g2 * inv
    shift = be2 - mean * scale

    # ---- pass 2: normalize + LeakyReLU (lane-dense elementwise) --------------
    y_blk = pl.pallas_call(
        bn_act_kernel,
        grid=(N, n_rt, n_co),
        in_specs=[
            pl.BlockSpec((1, 1, flat, TCO), lambda n, r, j: (n, r, 0, j)),
            pl.BlockSpec((1, TCO), lambda n, r, j: (0, j)),
            pl.BlockSpec((1, TCO), lambda n, r, j: (0, j)),
        ],
        out_specs=pl.BlockSpec((1, 1, flat, TCO), lambda n, r, j: (n, r, 0, j)),
        out_shape=jax.ShapeDtypeStruct((N, n_rt, flat, Cpad), jnp.float32),
        compiler_params=cparams,
    )(conv_out, scale, shift)
    # TODO(synk): emit bf16 here (and keep NHWC end-to-end in a real YOLO stack)
    # if the consumer accepts it; f32 NCHW is kept to match the PyTorch interface.

    y = y_blk.reshape(N, Hq, Wq, Cpad)[:, :H, :W, :Cout]
    return jnp.transpose(y, (0, 3, 1, 2))


def reference(x_nchw, w_oihw, bias, gamma, beta, conv_dtype=jnp.float32):
    """Pure-JAX reference matching PyTorch YoloBlock forward (training BN)."""
    conv = jax.lax.conv_general_dilated(
        x_nchw.astype(conv_dtype), w_oihw.astype(conv_dtype),
        window_strides=(1, 1), padding="SAME",
        dimension_numbers=("NCHW", "OIHW", "NCHW"),
        preferred_element_type=jnp.float32)
    conv = conv + bias[None, :, None, None]
    mean = jnp.mean(conv, axis=(0, 2, 3), keepdims=True)
    var = jnp.mean((conv - mean) ** 2, axis=(0, 2, 3), keepdims=True)
    y = (conv - mean) * jax.lax.rsqrt(var + BN_EPS)
    y = y * gamma[None, :, None, None] + beta[None, :, None, None]
    return jnp.where(y >= 0, y, NEG_SLOPE * y)


if __name__ == "__main__":
    def run_case(name, N, Cin, Cout, H, W, K, row_tile):
        key = jax.random.PRNGKey(0)
        k1, k2, k3, k4, k5 = jax.random.split(key, 5)
        x = jax.random.normal(k1, (N, Cin, H, W), jnp.float32)
        w = 0.1 * jax.random.normal(k2, (Cout, Cin, K, K), jnp.float32)
        b = 0.1 * jax.random.normal(k3, (Cout,), jnp.float32)
        gamma = 1.0 + 0.1 * jax.random.normal(k4, (Cout,), jnp.float32)
        beta = 0.1 * jax.random.normal(k5, (Cout,), jnp.float32)

        out = jax.block_until_ready(
            yolo_block(x, w, b, gamma, beta, row_tile=row_tile))
        assert out.shape == (N, Cout, H, W), (name, out.shape)

        # Against a reference that also uses bf16 conv operands (same math as
        # the kernel modulo the bf16 rounding of the stored conv intermediate).
        ref_bf = reference(x, w, b, gamma, beta, conv_dtype=jnp.bfloat16)
        err_bf = float(jnp.max(jnp.abs(out - ref_bf)))
        assert jnp.allclose(out, ref_bf, atol=2e-2, rtol=2e-2), (name, err_bf)

        # Looser check against the full-f32 PyTorch-equivalent reference.
        ref_fp = reference(x, w, b, gamma, beta, conv_dtype=jnp.float32)
        err_fp = float(jnp.max(jnp.abs(out - ref_fp)))
        assert jnp.allclose(out, ref_fp, atol=6e-2, rtol=6e-2), (name, err_fp)

    # Small-Cin "stem" layer: width-fused im2col path, YOLO-style odd 13x13
    # spatial size (exercises the stats mask + 2 row chunks with halo).
    run_case("fused", N=2, Cin=4, Cout=8, H=13, W=13, K=3, row_tile=8)
    # Large-Cin layer: direct K*K-tap path (no im2col), auto row tile.
    run_case("direct", N=1, Cin=128, Cout=16, H=16, W=16, K=3, row_tile=None)

    print("KERNEL_OK")
</pallas_src>

<mosaic_0001>
module attributes {stable_mosaic.version = 11 : i64} {
  func.func @kernel(%arg0: i32, %arg1: i32, %arg2: i32, %arg3: memref<1x1x10x16x12xbf16, #tpu.memory_space<vmem>>, %arg4: memref<3x12x128xbf16, #tpu.memory_space<vmem>>, %arg5: memref<1x128x1xf32, #tpu.memory_space<vmem>>, %arg6: memref<1x1x128x128xbf16, #tpu.memory_space<vmem>>, %arg7: memref<1x1x1x128xf32, #tpu.memory_space<vmem>>, %arg8: memref<1x1x1x128xf32, #tpu.memory_space<vmem>>, %arg9: memref<128x128xf32, #tpu.memory_space<vmem>>) attributes {dimension_semantics = [#tpu.dimension_semantics<parallel>, #tpu.dimension_semantics<parallel>, #tpu.dimension_semantics<parallel>], iteration_bounds = array<i64: 2, 2, 1>, scalar_prefetch = 0 : i64, scratch_operands = 1 : i64, tpu.core_type = #tpu.core_type<tc>, window_params = [{transform_indices = @transform_0, window_bounds = array<i64: 1, 1, 10, 16, 12>}, {transform_indices = @transform_1, window_bounds = array<i64: 3, 12, 128>}, {transform_indices = @transform_2, window_bounds = array<i64: 1, 128, 1>}, {transform_indices = @transform_3, window_bounds = array<i64: 1, 1, 128, 128>}, {transform_indices = @transform_4, window_bounds = array<i64: 1, 1, 1, 128>}, {transform_indices = @transform_5, window_bounds = array<i64: 1, 1, 1, 128>}]} {
    %c0 = arith.constant 0 : index
    %c0_0 = arith.constant 0 : index
    %c0_1 = arith.constant 0 : index
    %c0_2 = arith.constant 0 : index
    %c0_3 = arith.constant 0 : index
    %0 = vector.load %arg3[%c0, %c0_0, %c0_1, %c0_2, %c0_3] : memref<1x1x10x16x12xbf16, #tpu.memory_space<vmem>>, vector<1x1x8x16x12xbf16>
    %1 = vector.shape_cast %0 : vector<1x1x8x16x12xbf16> to vector<8x16x12xbf16>
    %2 = vector.shape_cast %1 : vector<8x16x12xbf16> to vector<128x12xbf16>
    %c0_4 = arith.constant 0 : index
    %c0_5 = arith.constant 0 : index
    %c0_6 = arith.constant 0 : index
    %3 = vector.load %arg4[%c0_4, %c0_5, %c0_6] : memref<3x12x128xbf16, #tpu.memory_space<vmem>>, vector<1x12x128xbf16>
    %4 = vector.shape_cast %3 : vector<1x12x128xbf16> to vector<12x128xbf16>
    %cst = arith.constant dense<0.000000e+00> : vector<128x128xf32>
    %5 = tpu.matmul %2, %4, %cst {dimension_numbers = #tpu.dot_dimension_numbers<[1], [0], [0], [1], [0, 0, 1, 1], [], []>} : vector<128x12xbf16>, vector<12x128xbf16>, vector<128x128xf32> -> vector<128x128xf32>
    %c0_7 = arith.constant 0 : index
    %c0_8 = arith.constant 0 : index
    %6 = vector.load %arg9[%c0_7, %c0_8] : memref<128x128xf32, #tpu.memory_space<vmem>>, vector<128x128xf32>
    tpu.vector_store %arg9[%c0_7, %c0_8], %5 {strides = array<i32>} : memref<128x128xf32, #tpu.memory_space<vmem>>, vector<128x128xf32>,
    %c0_9 = arith.constant 0 : index
    %c0_10 = arith.constant 0 : index
    %c1 = arith.constant 1 : index
    %c0_11 = arith.constant 0 : index
    %c0_12 = arith.constant 0 : index
    %7 = vector.load %arg3[%c0_9, %c0_10, %c1, %c0_11, %c0_12] : memref<1x1x10x16x12xbf16, #tpu.memory_space<vmem>>, vector<1x1x8x16x12xbf16>
    %8 = vector.shape_cast %7 : vector<1x1x8x16x12xbf16> to vector<8x16x12xbf16>
    %9 = vector.shape_cast %8 : vector<8x16x12xbf16> to vector<128x12xbf16>
    %c1_13 = arith.constant 1 : index
    %c0_14 = arith.constant 0 : index
    %c0_15 = arith.constant 0 : index
    %10 = vector.load %arg4[%c1_13, %c0_14, %c0_15] : memref<3x12x128xbf16, #tpu.memory_space<vmem>>, vector<1x12x128xbf16>
    %11 = vector.shape_cast %10 : vector<1x12x128xbf16> to vector<12x128xbf16>
    %cst_16 = arith.constant dense<0.000000e+00> : vector<128x128xf32>
    %12 = tpu.matmul %9, %11, %cst_16 {dimension_numbers = #tpu.dot_dimension_numbers<[1], [0], [0], [1], [0, 0, 1, 1], [], []>} : vector<128x12xbf16>, vector<12x128xbf16>, vector<128x128xf32> -> vector<128x128xf32>
    %c0_17 = arith.constant 0 : index
    %c0_18 = arith.constant 0 : index
    %13 = vector.load %arg9[%c0_17, %c0_18] : memref<128x128xf32, #tpu.memory_space<vmem>>, vector<128x128xf32>
    %14 = arith.addf %13, %12 : vector<128x128xf32>
    %c0_19 = arith.constant 0 : index
    %c0_20 = arith.constant 0 : index
    %15 = vector.load %arg9[%c0_19, %c0_20] : memref<128x128xf32, #tpu.memory_space<vmem>>, vector<128x128xf32>
    tpu.vector_store %arg9[%c0_19, %c0_20], %14 {strides = array<i32>} : memref<128x128xf32, #tpu.memory_space<vmem>>, vector<128x128xf32>,
    %c0_21 = arith.constant 0 : index
    %c0_22 = arith.constant 0 : index
    %c2 = arith.constant 2 : index
    %c0_23 = arith.constant 0 : index
    %c0_24 = arith.constant 0 : index
    %16 = vector.load %arg3[%c0_21, %c0_22, %c2, %c0_23, %c0_24] : memref<1x1x10x16x12xbf16, #tpu.memory_space<vmem>>, vector<1x1x8x16x12xbf16>
    %17 = vector.shape_cast %16 : vector<1x1x8x16x12xbf16> to vector<8x16x12xbf16>
    %18 = vector.shape_cast %17 : vector<8x16x12xbf16> to vector<128x12xbf16>
    %c2_25 = arith.constant 2 : index
    %c0_26 = arith.constant 0 : index
    %c0_27 = arith.constant 0 : index
    %19 = vector.load %arg4[%c2_25, %c0_26, %c0_27] : memref<3x12x128xbf16, #tpu.memory_space<vmem>>, vector<1x12x128xbf16>
    %20 = vector.shape_cast %19 : vector<1x12x128xbf16> to vector<12x128xbf16>
    %cst_28 = arith.constant dense<0.000000e+00> : vector<128x128xf32>
    %21 = tpu.matmul %18, %20, %cst_28 {dimension_numbers = #tpu.dot_dimension_numbers<[1], [0], [0], [1], [0, 0, 1, 1], [], []>} : vector<128x12xbf16>, vector<12x128xbf16>, vector<128x128xf32> -> vector<128x128xf32>
    %c0_29 = arith.constant 0 : index
    %c0_30 = arith.constant 0 : index
    %22 = vector.load %arg9[%c0_29, %c0_30] : memref<128x128xf32, #tpu.memory_space<vmem>>, vector<128x128xf32>
    %23 = arith.addf %22, %21 : vector<128x128xf32>
    %c0_31 = arith.constant 0 : index
    %c0_32 = arith.constant 0 : index
    %24 = vector.load %arg9[%c0_31, %c0_32] : memref<128x128xf32, #tpu.memory_space<vmem>>, vector<128x128xf32>
    tpu.vector_store %arg9[%c0_31, %c0_32], %23 {strides = array<i32>} : memref<128x128xf32, #tpu.memory_space<vmem>>, vector<128x128xf32>,
    %c0_33 = arith.constant 0 : index
    %c0_34 = arith.constant 0 : index
    %25 = vector.load %arg9[%c0_33, %c0_34] : memref<128x128xf32, #tpu.memory_space<vmem>>, vector<128x128xf32>
    %26 = arith.truncf %25 : vector<128x128xf32> to vector<128x128xbf16>
    %c0_35 = arith.constant 0 : index
    %c0_36 = arith.constant 0 : index
    %c0_37 = arith.constant 0 : index
    %c0_38 = arith.constant 0 : index
    %27 = vector.load %arg6[%c0_35, %c0_36, %c0_37, %c0_38] : memref<1x1x128x128xbf16, #tpu.memory_space<vmem>>, vector<1x1x128x128xbf16>
    %28 = vector.shape_cast %27 : vector<1x1x128x128xbf16> to vector<128x128xbf16>
    %29 = vector.shape_cast %26 : vector<128x128xbf16> to vector<1x1x128x128xbf16>
    tpu.vector_store %arg6[%c0_35, %c0_36, %c0_37, %c0_38], %29 {strides = array<i32>} : memref<1x1x128x128xbf16, #tpu.memory_space<vmem>>, vector<1x1x128x128xbf16>,
    %c0_39 = arith.constant 0 : index
    %c0_40 = arith.constant 0 : index
    %c0_41 = arith.constant 0 : index
    %30 = vector.load %arg5[%c0_39, %c0_40, %c0_41] : memref<1x128x1xf32, #tpu.memory_space<vmem>>, vector<1x128x1xf32>
    %31 = vector.shape_cast %30 : vector<1x128x1xf32> to vector<128x1xf32>
    %32 = vector.broadcast %31 : vector<128x1xf32> to vector<128x128xf32>
    %33 = arith.mulf %25, %32 : vector<128x128xf32>
    %cst_42 = arith.constant dense<0.000000e+00> : vector<128xf32>
    %34 = vector.multi_reduction <add>, %33, %cst_42 [0] : vector<128x128xf32> to vector<128xf32>
    %35 = vector.shape_cast %34 : vector<128xf32> to vector<1x128xf32>
    %c0_43 = arith.constant 0 : index
    %c0_44 = arith.constant 0 : index
    %c0_45 = arith.constant 0 : index
    %c0_46 = arith.constant 0 : index
    %36 = vector.load %arg7[%c0_43, %c0_44, %c0_45, %c0_46] : memref<1x1x1x128xf32, #tpu.memory_space<vmem>>, vector<1x1x1x128xf32>
    %37 = vector.shape_cast %36 : vector<1x1x1x128xf32> to vector<1x128xf32>
    %38 = vector.shape_cast %35 : vector<1x128xf32> to vector<1x1x1x128xf32>
    tpu.vector_store %arg7[%c0_43, %c0_44, %c0_45, %c0_46], %38 {strides = array<i32>} : memref<1x1x1x128xf32, #tpu.memory_space<vmem>>, vector<1x1x1x128xf32>,
    %39 = arith.mulf %33, %25 : vector<128x128xf32>
    %cst_47 = arith.constant dense<0.000000e+00> : vector<128xf32>
    %40 = vector.multi_reduction <add>, %39, %cst_47 [0] : vector<128x128xf32> to vector<128xf32>
    %41 = vector.shape_cast %40 : vector<128xf32> to vector<1x128xf32>
    %c0_48 = arith.constant 0 : index
    %c0_49 = arith.constant 0 : index
    %c0_50 = arith.constant 0 : index
    %c0_51 = arith.constant 0 : index
    %42 = vector.load %arg8[%c0_48, %c0_49, %c0_50, %c0_51] : memref<1x1x1x128xf32, #tpu.memory_space<vmem>>, vector<1x1x1x128xf32>
    %43 = vector.shape_cast %42 : vector<1x1x1x128xf32> to vector<1x128xf32>
    %44 = vector.shape_cast %41 : vector<1x128xf32> to vector<1x1x1x128xf32>
    tpu.vector_store %arg8[%c0_48, %c0_49, %c0_50, %c0_51], %44 {strides = array<i32>} : memref<1x1x1x128xf32, #tpu.memory_space<vmem>>, vector<1x1x1x128xf32>,
    return
  }
  func.func @transform_0(%arg0: i32, %arg1: i32, %arg2: i32) -> (i32, i32, i32, i32, i32) {
    %c0_i32 = arith.constant 0 : i32
    %c0_i32_0 = arith.constant 0 : i32
    %c0_i32_1 = arith.constant 0 : i32
    %c0_i32_2 = arith.constant 0 : i32
    return %arg0, %arg1, %c0_i32, %c0_i32_0, %c0_i32_1 : i32, i32, i32, i32, i32
  }
  func.func @transform_1(%arg0: i32, %arg1: i32, %arg2: i32) -> (i32, i32, i32) {
    %c0_i32 = arith.constant 0 : i32
    %c0_i32_0 = arith.constant 0 : i32
    %c0_i32_1 = arith.constant 0 : i32
    return %c0_i32, %c0_i32_0, %arg2 : i32, i32, i32
  }
  func.func @transform_2(%arg0: i32, %arg1: i32, %arg2: i32) -> (i32, i32, i32) {
    %c0_i32 = arith.constant 0 : i32
    %c0_i32_0 = arith.constant 0 : i32
    %c0_i32_1 = arith.constant 0 : i32
    return %arg1, %c0_i32, %c0_i32_0 : i32, i32, i32
  }
  func.func @transform_3(%arg0: i32, %arg1: i32, %arg2: i32) -> (i32, i32, i32, i32) {
    %c0_i32 = arith.constant 0 : i32
    %c0_i32_0 = arith.constant 0 : i32
    return %arg0, %arg1, %c0_i32, %arg2 : i32, i32, i32, i32
  }
  func.func @transform_4(%arg0: i32, %arg1: i32, %arg2: i32) -> (i32, i32, i32, i32) {
    %c0_i32 = arith.constant 0 : i32
    %c0_i32_0 = arith.constant 0 : i32
    return %arg0, %arg1, %c0_i32, %arg2 : i32, i32, i32, i32
  }
  func.func @transform_5(%arg0: i32, %arg1: i32, %arg2: i32) -> (i32, i32, i32, i32) {
    %c0_i32 = arith.constant 0 : i32
    %c0_i32_0 = arith.constant 0 : i32
    return %arg0, %arg1, %c0_i32, %arg2 : i32, i32, i32, i32
  }
}

module attributes {stable_mosaic.version = 11 : i64} {
  func.func @bn_act_kernel(%arg0: i32, %arg1: i32, %arg2: i32, %arg3: memref<1x1x128x128xbf16, #tpu.memory_space<vmem>>, %arg4: memref<1x128xf32, #tpu.memory_space<vmem>>, %arg5: memref<1x128xf32, #tpu.memory_space<vmem>>, %arg6: memref<1x1x128x128xf32, #tpu.memory_space<vmem>>) attributes {dimension_semantics = [#tpu.dimension_semantics<parallel>, #tpu.dimension_semantics<parallel>, #tpu.dimension_semantics<parallel>], iteration_bounds = array<i64: 2, 2, 1>, scalar_prefetch = 0 : i64, scratch_operands = 0 : i64, tpu.core_type = #tpu.core_type<tc>, window_params = [{transform_indices = @transform_0, window_bounds = array<i64: 1, 1, 128, 128>}, {transform_indices = @transform_1, window_bounds = array<i64: 1, 128>}, {transform_indices = @transform_2, window_bounds = array<i64: 1, 128>}, {transform_indices = @transform_3, window_bounds = array<i64: 1, 1, 128, 128>}]} {
    %c0 = arith.constant 0 : index
    %c0_0 = arith.constant 0 : index
    %c0_1 = arith.constant 0 : index
    %c0_2 = arith.constant 0 : index
    %0 = vector.load %arg3[%c0, %c0_0, %c0_1, %c0_2] : memref<1x1x128x128xbf16, #tpu.memory_space<vmem>>, vector<1x1x128x128xbf16>
    %1 = vector.shape_cast %0 : vector<1x1x128x128xbf16> to vector<128x128xbf16>
    %2 = arith.extf %1 : vector<128x128xbf16> to vector<128x128xf32>
    %c0_3 = arith.constant 0 : index
    %c0_4 = arith.constant 0 : index
    %3 = vector.load %arg4[%c0_3, %c0_4] : memref<1x128xf32, #tpu.memory_space<vmem>>, vector<1x128xf32>
    %4 = vector.broadcast %3 : vector<1x128xf32> to vector<128x128xf32>
    %5 = arith.mulf %2, %4 : vector<128x128xf32>
    %c0_5 = arith.constant 0 : index
    %c0_6 = arith.constant 0 : index
    %6 = vector.load %arg5[%c0_5, %c0_6] : memref<1x128xf32, #tpu.memory_space<vmem>>, vector<1x128xf32>
    %7 = vector.broadcast %6 : vector<1x128xf32> to vector<128x128xf32>
    %8 = arith.addf %5, %7 : vector<128x128xf32>
    %cst = arith.constant 0.000000e+00 : f32
    %9 = vector.broadcast %cst : f32 to vector<128x128xf32>
    %10 = arith.cmpf oge, %8, %9 : vector<128x128xf32>
    %cst_7 = arith.constant 1.000000e-01 : f32
    %11 = vector.broadcast %cst_7 : f32 to vector<128x128xf32>
    %12 = arith.mulf %11, %8 : vector<128x128xf32>
    %13 = arith.select %10, %8, %12 : vector<128x128xi1>, vector<128x128xf32>
    %c0_8 = arith.constant 0 : index
    %c0_9 = arith.constant 0 : index
    %c0_10 = arith.constant 0 : index
    %c0_11 = arith.constant 0 : index
    %14 = vector.load %arg6[%c0_8, %c0_9, %c0_10, %c0_11] : memref<1x1x128x128xf32, #tpu.memory_space<vmem>>, vector<1x1x128x128xf32>
    %15 = vector.shape_cast %14 : vector<1x1x128x128xf32> to vector<128x128xf32>
    %16 = vector.shape_cast %13 : vector<128x128xf32> to vector<1x1x128x128xf32>
    tpu.vector_store %arg6[%c0_8, %c0_9, %c0_10, %c0_11], %16 {strides = array<i32>} : memref<1x1x128x128xf32, #tpu.memory_space<vmem>>, vector<1x1x128x128xf32>,
    return
  }
  func.func @transform_0(%arg0: i32, %arg1: i32, %arg2: i32) -> (i32, i32, i32, i32) {
    %c0_i32 = arith.constant 0 : i32
    %c0_i32_0 = arith.constant 0 : i32
    return %arg0, %arg1, %c0_i32, %arg2 : i32, i32, i32, i32
  }
  func.func @transform_1(%arg0: i32, %arg1: i32, %arg2: i32) -> (i32, i32) {
    %c0_i32 = arith.constant 0 : i32
    %c0_i32_0 = arith.constant 0 : i32
    return %c0_i32, %arg2 : i32, i32
  }
  func.func @transform_2(%arg0: i32, %arg1: i32, %arg2: i32) -> (i32, i32) {
    %c0_i32 = arith.constant 0 : i32
    %c0_i32_0 = arith.constant 0 : i32
    return %c0_i32, %arg2 : i32, i32
  }
  func.func @transform_3(%arg0: i32, %arg1: i32, %arg2: i32) -> (i32, i32, i32, i32) {
    %c0_i32 = arith.constant 0 : i32
    %c0_i32_0 = arith.constant 0 : i32
    return %arg0, %arg1, %c0_i32, %arg2 : i32, i32, i32, i32
  }
}

</mosaic_0001>

<llo_original>
// kernel: yolo_block.3
$region0: #{yolo_block.3}
  #allocation0 [shape = 'u32[]', space=smem, size = 0x4, offset = 0x4, fixed_abs, tag = 'smem constant byte address 0x4 - core index']
  #allocation1 [shape = 'u32[144,128]{1,0:T(1,128)}', space=vmem, size = 0x12000, scoped, tag = 'internal scratch']
  %s0 = inlined_call_operand.vmem [shape: bf16[2,2,128,128], index: 0, kind: input, shape index: {}]
  %s1 = inlined_call_operand.vmem [shape: f32[1,128], index: 1, kind: input, shape index: {}]
  %s2 = inlined_call_operand.vmem [shape: f32[1,128], index: 2, kind: input, shape index: {}]
  %s3 = inlined_call_operand.vmem [shape: f32[2,2,128,128], index: 3, kind: output, shape index: {}]
  %s4 = sld [smem:[#allocation0]]
  $region45: #{yolo_block.3} parent=0
    _
  %s6 = ssub.s32 1, %s4
  %s7 = scalar_select 0, %s6, %s4
  loop: start=0, step=1, limit=6
  $region2: #{yolo_block.3} parent=0 // loop_pre_header
    _
  $region3: #{yolo_block.3} parent=0 // loop_header
    %s9 = sphi 0, %s13
    %p10 = scmp.ge.s32.totalorder %s9, 6
    %s16 = sphi 0, %s35
    %s17 = sphi 0, %s31
    %s18 = sphi 0, %s27
    %s19 = sphi 0, %s16
    %s20 = sphi 0, %s17
    %s21 = sphi 0, %s18
    %s22 = sphi 0, %s19
    %s23 = sphi 0, %s20
    %s24 = sphi 0, %s21
    %s42 = sphi 0, %s44
    %s45 = sphi 0, %s42
    %s46 = sphi 0, %s45
    %s62 = sphi 0, %s46
    %s68 = sphi 0, %s70
    %s71 = sphi 0, %s68
    %s72 = sphi 0, %s71
    %s88 = sphi 0, %s72
    %s94 = sphi 0, %s96
    %s97 = sphi 0, %s94
    %s98 = sphi 0, %s97
    %s114 = sphi 0, %s98
    %s124 = sphi 0, %s126
    %s127 = sphi 0, %s124
    %s128 = sphi 0, %s127
    %s144 = sphi 0, %s128
  $region4: #{yolo_block.3} parent=0 // loop_header_branch
    %12 = sbr.rel (%p10) target = $region8
  $region5: #{yolo_block.3} parent=0 // loop_body
    %s14 = ssub.s32 %s9, 1
    %s15 = ssub.s32 %s9, 2
    %s25 = sadd.s32 1, %s18
    %p26 = scmp.ge.s32.totalorder %s25, 1
    %s27 = scalar_select %p26, 0, %s25
    %s28 = sadd.s32 1, %s17
    %s29 = scalar_select %p26, %s28, %s17
    %p30 = scmp.ge.s32.totalorder %s29, 2
    %s31 = scalar_select %p30, 0, %s29
    %s32 = sadd.s32 1, %s16
    %s33 = scalar_select %p30, %s32, %s16
    %p34 = scmp.ge.s32.totalorder %s33, 2
    %s35 = scalar_select %p34, 0, %s33
    %s36 = ssub.s32 %s16, %s35
    %s37 = ssub.s32 %s17, %s31
    %s38 = sor.u32 %s36, %s37
    %s39 = ssub.s32 %s18, %s27
    %s40 = sor.u32 %s38, %s39
    %p41 = scmp.eq.s32.totalorder %s40, 0
    %s43 = sadd.s32 %s42, 1
    %s44 = scalar_select %p41, %s42, %s43
    %p47 = pneg %p41
    %p48 = scmp.eq.s32.totalorder %s9, 3
    %p49 = por %p47, %p48
    %p50 = scmp.ne.s32.totalorder %s42, %s45
    %p51 = scmp.eq.s32.totalorder %s9, 0
    %p52 = por %p50, %p51
    %p53 = scmp.ne.s32.totalorder %s42, %s45
    %p54 = scmp.eq.s32.totalorder %s14, 3
    %p55 = por %p53, %p54
    %p56 = scmp.ne.s32.totalorder %s45, %s46
    %p57 = scmp.eq.s32.totalorder %s14, 0
    %p58 = por %p56, %p57
    %p59 = scmp.ne.s32.totalorder %s45, %s46
    %p60 = scmp.eq.s32.totalorder %s15, 3
    %p61 = por %p59, %p60
    %p63 = scmp.ne.s32.totalorder %s46, %s62
    %p64 = scmp.eq.s32.totalorder %s15, 0
    %p65 = por %p63, %p64
    %s66 = ssub.s32 %s18, %s27
    %p67 = scmp.eq.s32.totalorder %s66, 0
    %s69 = sadd.s32 %s68, 1
    %s70 = scalar_select %p67, %s68, %s69
    %p73 = pneg %p67
    %p74 = scmp.eq.s32.totalorder %s9, 3
    %p75 = por %p73, %p74
    %p76 = scmp.ne.s32.totalorder %s68, %s71
    %p77 = scmp.eq.s32.totalorder %s9, 0
    %p78 = por %p76, %p77
    %p79 = scmp.ne.s32.totalorder %s68, %s71
    %p80 = scmp.eq.s32.totalorder %s14, 3
    %p81 = por %p79, %p80
    %p82 = scmp.ne.s32.totalorder %s71, %s72
    %p83 = scmp.eq.s32.totalorder %s14, 0
    %p84 = por %p82, %p83
    %p85 = scmp.ne.s32.totalorder %s71, %s72
    %p86 = scmp.eq.s32.totalorder %s15, 3
    %p87 = por %p85, %p86
    %p89 = scmp.ne.s32.totalorder %s72, %s88
    %p90 = scmp.eq.s32.totalorder %s15, 0
    %p91 = por %p89, %p90
    %s92 = ssub.s32 %s18, %s27
    %p93 = scmp.eq.s32.totalorder %s92, 0
    %s95 = sadd.s32 %s94, 1
    %s96 = scalar_select %p93, %s94, %s95
    %p99 = pneg %p93
    %p100 = scmp.eq.s32.totalorder %s9, 3
    %p101 = por %p99, %p100
    %p102 = scmp.ne.s32.totalorder %s94, %s97
    %p103 = scmp.eq.s32.totalorder %s9, 0
    %p104 = por %p102, %p103
    %p105 = scmp.ne.s32.totalorder %s94, %s97
    %p106 = scmp.eq.s32.totalorder %s14, 3
    %p107 = por %p105, %p106
    %p108 = scmp.ne.s32.totalorder %s97, %s98
    %p109 = scmp.eq.s32.totalorder %s14, 0
    %p110 = por %p108, %p109
    %p111 = scmp.ne.s32.totalorder %s97, %s98
    %p112 = scmp.eq.s32.totalorder %s15, 3
    %p113 = por %p111, %p112
    %p115 = scmp.ne.s32.totalorder %s98, %s114
    %p116 = scmp.eq.s32.totalorder %s15, 0
    %p117 = por %p115, %p116
    %s118 = ssub.s32 %s16, %s35
    %s119 = ssub.s32 %s17, %s31
    %s120 = sor.u32 %s118, %s119
    %s121 = ssub.s32 %s18, %s27
    %s122 = sor.u32 %s120, %s121
    %p123 = scmp.eq.s32.totalorder %s122, 0
    %s125 = sadd.s32 %s124, 1
    %s126 = scalar_select %p123, %s124, %s125
    %p129 = pneg %p123
    %p130 = scmp.eq.s32.totalorder %s9, 3
    %p131 = por %p129, %p130
    %p132 = scmp.ne.s32.totalorder %s124, %s127
    %p133 = scmp.eq.s32.totalorder %s9, 0
    %p134 = por %p132, %p133
    %p135 = scmp.ne.s32.totalorder %s124, %s127
    %p136 = scmp.eq.s32.totalorder %s14, 3
    %p137 = por %p135, %p136
    %p138 = scmp.ne.s32.totalorder %s127, %s128
    %p139 = scmp.eq.s32.totalorder %s14, 0
    %p140 = por %p138, %p139
    %p141 = scmp.ne.s32.totalorder %s127, %s128
    %p142 = scmp.eq.s32.totalorder %s15, 3
    %p143 = por %p141, %p142
    %p145 = scmp.ne.s32.totalorder %s128, %s144
    %p146 = scmp.eq.s32.totalorder %s15, 0
    %p147 = por %p145, %p146
    %p148 = scmp.le.s32.totalorder 1, %s9
    %p149 = scmp.lt.s32.totalorder %s9, 5
    %p150 = pnand %p148, %p149
    %p151 = pneg %p150
    // Predicated region
    $region9: #{yolo_block.3} parent=5 // pred_check
      _
    $region10: #{yolo_block.3} parent=5 // pred_check_branch
      %153 = sbr.rel (%p150) target = $region12
    $region11: #{yolo_block.3} parent=5 // pred_region
      %s154 = ssub.s32 %s9, 1
      // Predicated region
      $region13: #{yolo_block.3} parent=11 // pred_check
        %p155 = pneg %p84
      $region14: #{yolo_block.3} parent=11 // pred_check_branch
        %157 = sbr.rel (%p155) target = $region16
      $region15: #{yolo_block.3} parent=11 // pred_region
        %p158 = scmp.lt.s32.totalorder %s21, 0
        %s159 = scalar_select %p158, %s21, 0
        %s160 = scalar_lea.vmem %s1, %s159
      $region16: #{yolo_block.3} parent=11 // pred_fallthru
        _
      // Predicated region
      $region17: #{yolo_block.3} parent=11 // pred_check
        %p161 = pneg %p110
      $region18: #{yolo_block.3} parent=11 // pred_check_branch
        %163 = sbr.rel (%p161) target = $region20
      $region19: #{yolo_block.3} parent=11 // pred_region
        %p164 = scmp.lt.s32.totalorder %s21, 0
        %s165 = scalar_select %p164, %s21, 0
        %s166 = scalar_lea.vmem %s2, %s165
      $region20: #{yolo_block.3} parent=11 // pred_fallthru
        _
    $region12: #{yolo_block.3} parent=5 // pred_fallthru
      _
    %p167 = scmp.lt.s32.totalorder %s9, 4
    // Predicated region
    $region21: #{yolo_block.3} parent=5 // pred_check
      %p168 = pneg %p167
    $region22: #{yolo_block.3} parent=5 // pred_check_branch
      %170 = sbr.rel (%p168) target = $region24
    $region23: #{yolo_block.3} parent=5 // pred_region
      // Predicated region
      $region25: #{yolo_block.3} parent=23 // pred_check
        %p171 = pneg %p52
      $region26: #{yolo_block.3} parent=23 // pred_check_branch
        %173 = sbr.rel (%p171) target = $region28
      $region27: #{yolo_block.3} parent=23 // pred_region
        %p174 = scmp.lt.s32.totalorder %s16, 1
        %s175 = scalar_select %p174, %s16, 1
        %p176 = scmp.lt.s32.totalorder %s17, 1
        %s177 = scalar_select %p176, %s17, 1
        %p178 = scmp.lt.s32.totalorder %s18, 0
        %s179 = scalar_select %p178, %s18, 0
        %s180 = smul.addr %s177, 16
        %s181 = sadd.s32 %s179, %s180
        %s182 = smul.addr %s175, 32
        %s183 = sadd.s32 %s181, %s182
        %s184 = smul.addr %s183, 4
        %s185 = scalar_lea.vmem %s0, %s184
      $region28: #{yolo_block.3} parent=23 // pred_fallthru
        _
    $region24: #{yolo_block.3} parent=5 // pred_fallthru
      _
    %p186 = scmp.le.s32.totalorder 1, %s9
    %p187 = scmp.lt.s32.totalorder %s9, 5
    %p188 = pnand %p186, %p187
    %p189 = pneg %p188
    // Predicated region
    $region29: #{yolo_block.3} parent=5 // pred_check
      _
    $region30: #{yolo_block.3} parent=5 // pred_check_branch
      %191 = sbr.rel (%p188) target = $region32
    $region31: #{yolo_block.3} parent=5 // pred_region
      %s192 = ssub.s32 %s9, 1
      %p193 = scmp.lt.s32.totalorder %s19, 1
      %s194 = scalar_select %p193, %s19, 1
      %p195 = scmp.lt.s32.totalorder %s20, 1
      %s196 = scalar_select %p195, %s20, 1
      %p197 = scmp.lt.s32.totalorder %s21, 0
      %s198 = scalar_select %p197, %s21, 0
      %s199 = smul.addr %s196, 16
      %s200 = sadd.s32 %s198, %s199
      %s201 = smul.addr %s194, 32
      %s202 = sadd.s32 %s200, %s201
      %s203 = smul.addr %s202, 4
      %s204 = scalar_lea.vmem %s0, %s203
      %p205 = pneg %p58
      %p206 = pneg %p55
      %p207 = scmp.lt.s32.totalorder %s21, 0
      %s208 = scalar_select %p207, %s21, 0
      %s209 = scalar_lea.vmem %s1, %s208
      %p210 = pneg %p84
      %p211 = pneg %p81
      %p212 = scmp.lt.s32.totalorder %s21, 0
      %s213 = scalar_select %p212, %s21, 0
      %s214 = scalar_lea.vmem %s2, %s213
      %p215 = pneg %p110
      %p216 = pneg %p107
      %p217 = pneg %p140
      %p218 = pneg %p137
      %p219 = scmp.lt.s32.totalorder %s19, 1
      %s220 = scalar_select %p219, %s19, 1
      %p221 = scmp.lt.s32.totalorder %s20, 1
      %s222 = scalar_select %p221, %s20, 1
      %p223 = scmp.lt.s32.totalorder %s21, 0
      %s224 = scalar_select %p223, %s21, 0
      %s225 = smul.addr %s222, 16
      %s226 = sadd.s32 %s224, %s225
      %s227 = smul.addr %s220, 32
      %s228 = sadd.s32 %s226, %s227
      %s229 = smul.addr %s228, 8
      %s230 = scalar_lea.vmem %s3, %s229
      %p231 = scmp.lt.s32.totalorder %s19, 1
      %s232 = scalar_select %p231, %s19, 1
      %p233 = scmp.lt.s32.totalorder %s20, 1
      %s234 = scalar_select %p233, %s20, 1
      %p235 = scmp.lt.s32.totalorder %s21, 0
      %s236 = scalar_select %p235, %s21, 0
      %s237 = smul.addr %s234, 16
      %s238 = sadd.s32 %s236, %s237
      %s239 = smul.addr %s232, 32
      %s240 = sadd.s32 %s238, %s239
      %s241 = smul.addr %s240, 4
      %s242 = scalar_lea.vmem %s0, %s241
      %p243 = scmp.lt.s32.totalorder %s21, 0
      %s244 = scalar_select %p243, %s21, 0
      %s245 = scalar_lea.vmem %s1, %s244
      %p246 = scmp.lt.s32.totalorder %s21, 0
      %s247 = scalar_select %p246, %s21, 0
      %s248 = scalar_lea.vmem %s2, %s247
      %p249 = scmp.lt.s32.totalorder %s19, 1
      %s250 = scalar_select %p249, %s19, 1
      %p251 = scmp.lt.s32.totalorder %s20, 1
      %s252 = scalar_select %p251, %s20, 1
      %p253 = scmp.lt.s32.totalorder %s21, 0
      %s254 = scalar_select %p253, %s21, 0
      %s255 = smul.addr %s252, 16
      %s256 = sadd.s32 %s254, %s255
      %s257 = smul.addr %s250, 32
      %s258 = sadd.s32 %s256, %s257
      %s259 = smul.addr %s258, 8
      %s260 = scalar_lea.vmem %s3, %s259
      %v261 = vld [vmem:[%s242] sm:$0xf]
      %v262 = vld [vmem:[%s242 + $0x4] sm:$0xf]
      %v263 = vld [vmem:[%s242 + $0x8] sm:$0xf]
      %v264 = vld [vmem:[%s242 + $0xc] sm:$0xf]
      %v265 = vld [vmem:[%s242 + $0x10] sm:$0xf]
      %v266 = vld [vmem:[%s242 + $0x14] sm:$0xf]
      %v267 = vld [vmem:[%s242 + $0x18] sm:$0xf]
      %v268 = vld [vmem:[%s242 + $0x1c] sm:$0xf]
      %v269 = vld [vmem:[%s242 + $0x20] sm:$0xf]
      %v270 = vld [vmem:[%s242 + $0x24] sm:$0xf]
      %v271 = vld [vmem:[%s242 + $0x28] sm:$0xf]
      %v272 = vld [vmem:[%s242 + $0x2c] sm:$0xf]
      %v273 = vld [vmem:[%s242 + $0x30] sm:$0xf]
      %v274 = vld [vmem:[%s242 + $0x34] sm:$0xf]
      %v275 = vld [vmem:[%s242 + $0x38] sm:$0xf]
      %v276 = vld [vmem:[%s242 + $0x3c] sm:$0xf]
      %v277 = vunpack.c.l.bf16 %v261
      %v278 = vunpack.c.l.bf16 %v262
      %v279 = vunpack.c.l.bf16 %v263
      %v280 = vunpack.c.l.bf16 %v264
      %v281 = vunpack.c.l.bf16 %v265
      %v282 = vunpack.c.l.bf16 %v266
      %v283 = vunpack.c.l.bf16 %v267
      %v284 = vunpack.c.l.bf16 %v268
      %v285 = vunpack.c.l.bf16 %v269
      %v286 = vunpack.c.l.bf16 %v270
      %v287 = vunpack.c.l.bf16 %v271
      %v288 = vunpack.c.l.bf16 %v272
      %v289 = vunpack.c.l.bf16 %v273
      %v290 = vunpack.c.l.bf16 %v274
      %v291 = vunpack.c.l.bf16 %v275
      %v292 = vunpack.c.l.bf16 %v276
      %v293 = vld [vmem:[%s245] sm:$0x1]
      %v295 = vlaneseq
      %v296 = vshrl.u32 %v295, 7
      %v297 = vsub.s32 0, %v296
      %v298 = vrot.slane %v293, %v297
      %v300 = vmul.f32 %v277, %v298
      %v301 = vmul.f32 %v278, %v298
      %v302 = vmul.f32 %v279, %v298
      %v303 = vmul.f32 %v280, %v298
      %v304 = vmul.f32 %v281, %v298
      %v305 = vmul.f32 %v282, %v298
      %v306 = vmul.f32 %v283, %v298
      %v307 = vmul.f32 %v284, %v298
      %v308 = vmul.f32 %v285, %v298
      %v309 = vmul.f32 %v286, %v298
      %v310 = vmul.f32 %v287, %v298
      %v311 = vmul.f32 %v288, %v298
      %v312 = vmul.f32 %v289, %v298
      %v313 = vmul.f32 %v290, %v298
      %v314 = vmul.f32 %v291, %v298
      %v315 = vmul.f32 %v292, %v298
      %v316 = vld [vmem:[%s248] sm:$0x1]
      %v318 = vlaneseq
      %v319 = vshrl.u32 %v318, 7
      %v320 = vsub.s32 0, %v319
      %v321 = vrot.slane %v316, %v320
      %v323 = vadd.f32 %v300, %v321
      %v324 = vadd.f32 %v301, %v321
      %v325 = vadd.f32 %v302, %v321
      %v326 = vadd.f32 %v303, %v321
      %v327 = vadd.f32 %v304, %v321
      %v328 = vadd.f32 %v305, %v321
      %v329 = vadd.f32 %v306, %v321
      %v330 = vadd.f32 %v307, %v321
      %v331 = vadd.f32 %v308, %v321
      %v332 = vadd.f32 %v309, %v321
      %v333 = vadd.f32 %v310, %v321
      %v334 = vadd.f32 %v311, %v321
      %v335 = vadd.f32 %v312, %v321
      %v336 = vadd.f32 %v313, %v321
      %v337 = vadd.f32 %v314, %v321
      %v338 = vadd.f32 %v315, %v321
      %vm339 = vcmp.ge.f32.partialorder %v323, 0.0
      %vm340 = vcmp.ge.f32.partialorder %v324, 0.0
      %vm341 = vcmp.ge.f32.partialorder %v325, 0.0
      %vm342 = vcmp.ge.f32.partialorder %v326, 0.0
      %vm343 = vcmp.ge.f32.partialorder %v327, 0.0
      %vm344 = vcmp.ge.f32.partialorder %v328, 0.0
      %vm345 = vcmp.ge.f32.partialorder %v329, 0.0
      %vm346 = vcmp.ge.f32.partialorder %v330, 0.0
      %vm347 = vcmp.ge.f32.partialorder %v331, 0.0
      %vm348 = vcmp.ge.f32.partialorder %v332, 0.0
      %vm349 = vcmp.ge.f32.partialorder %v333, 0.0
      %vm350 = vcmp.ge.f32.partialorder %v334, 0.0
      %vm351 = vcmp.ge.f32.partialorder %v335, 0.0
      %vm352 = vcmp.ge.f32.partialorder %v336, 0.0
      %vm353 = vcmp.ge.f32.partialorder %v337, 0.0
      %vm354 = vcmp.ge.f32.partialorder %v338, 0.0
      %v355 = vmul.f32 %v323, 0.1
      %v356 = vmul.f32 %v324, 0.1
      %v357 = vmul.f32 %v325, 0.1
      %v358 = vmul.f32 %v326, 0.1
      %v359 = vmul.f32 %v327, 0.1
      %v360 = vmul.f32 %v328, 0.1
      %v361 = vmul.f32 %v329, 0.1
      %v362 = vmul.f32 %v330, 0.1
      %v363 = vmul.f32 %v331, 0.1
      %v364 = vmul.f32 %v332, 0.1
      %v365 = vmul.f32 %v333, 0.1
      %v366 = vmul.f32 %v334, 0.1
      %v367 = vmul.f32 %v335, 0.1
      %v368 = vmul.f32 %v336, 0.1
      %v369 = vmul.f32 %v337, 0.1
      %v370 = vmul.f32 %v338, 0.1
      %v371 = vsel %vm339, %v323, %v355
      %v372 = vsel %vm340, %v324, %v356
      %v373 = vsel %vm341, %v325, %v357
      %v374 = vsel %vm342, %v326, %v358
      %v375 = vsel %vm343, %v327, %v359
      %v376 = vsel %vm344, %v328, %v360
      %v377 = vsel %vm345, %v329, %v361
      %v378 = vsel %vm346, %v330, %v362
      %v379 = vsel %vm347, %v331, %v363
      %v380 = vsel %vm348, %v332, %v364
      %v381 = vsel %vm349, %v333, %v365
      %v382 = vsel %vm350, %v334, %v366
      %v383 = vsel %vm351, %v335, %v367
      %v384 = vsel %vm352, %v336, %v368
      %v385 = vsel %vm353, %v337, %v369
      %v386 = vsel %vm354, %v338, %v370
      %387 = vst [vmem:[%s260] sm:$0xff] %v371
      %388 = vst [vmem:[%s260 + $0x8] sm:$0xff] %v372
      %389 = vst [vmem:[%s260 + $0x10] sm:$0xff] %v373
      %390 = vst [vmem:[%s260 + $0x18] sm:$0xff] %v374
      %391 = vst [vmem:[%s260 + $0x20] sm:$0xff] %v375
      %392 = vst [vmem:[%s260 + $0x28] sm:$0xff] %v376
      %393 = vst [vmem:[%s260 + $0x30] sm:$0xff] %v377
      %394 = vst [vmem:[%s260 + $0x38] sm:$0xff] %v378
      %395 = vst [vmem:[%s260 + $0x40] sm:$0xff] %v379
      %396 = vst [vmem:[%s260 + $0x48] sm:$0xff] %v380
      %397 = vst [vmem:[%s260 + $0x50] sm:$0xff] %v381
      %398 = vst [vmem:[%s260 + $0x58] sm:$0xff] %v382
      %399 = vst [vmem:[%s260 + $0x60] sm:$0xff] %v383
      %400 = vst [vmem:[%s260 + $0x68] sm:$0xff] %v384
      %401 = vst [vmem:[%s260 + $0x70] sm:$0xff] %v385
      %402 = vst [vmem:[%s260 + $0x78] sm:$0xff] %v386
      %p403 = scmp.lt.s32.totalorder %s19, 1
      %s404 = scalar_select %p403, %s19, 1
      %p405 = scmp.lt.s32.totalorder %s20, 1
      %s406 = scalar_select %p405, %s20, 1
      %p407 = scmp.lt.s32.totalorder %s21, 0
      %s408 = scalar_select %p407, %s21, 0
      %s409 = smul.addr %s406, 16
      %s410 = sadd.s32 %s408, %s409
      %s411 = smul.addr %s404, 32
      %s412 = sadd.s32 %s410, %s411
      %s413 = smul.addr %s412, 8
      %s414 = scalar_lea.vmem %s3, %s413
      // Predicated region
      $region33: #{yolo_block.3} parent=31 // pred_check
        %p415 = pneg %p137
      $region34: #{yolo_block.3} parent=31 // pred_check_branch
        %417 = sbr.rel (%p415) target = $region36
      $region35: #{yolo_block.3} parent=31 // pred_region
        _
      $region36: #{yolo_block.3} parent=31 // pred_fallthru
        _
    $region32: #{yolo_block.3} parent=5 // pred_fallthru
      _
    %p418 = scmp.le.s32.totalorder 2, %s9
    // Predicated region
    $region37: #{yolo_block.3} parent=5 // pred_check
      %p419 = pneg %p418
    $region38: #{yolo_block.3} parent=5 // pred_check_branch
      %421 = sbr.rel (%p419) target = $region40
    $region39: #{yolo_block.3} parent=5 // pred_region
      %s422 = ssub.s32 %s9, 2
      // Predicated region
      $region41: #{yolo_block.3} parent=39 // pred_check
        %p423 = pneg %p143
      $region42: #{yolo_block.3} parent=39 // pred_check_branch
        %425 = sbr.rel (%p423) target = $region44
      $region43: #{yolo_block.3} parent=39 // pred_region
        %p426 = scmp.lt.s32.totalorder %s22, 1
        %s427 = scalar_select %p426, %s22, 1
        %p428 = scmp.lt.s32.totalorder %s23, 1
        %s429 = scalar_select %p428, %s23, 1
        %p430 = scmp.lt.s32.totalorder %s24, 0
        %s431 = scalar_select %p430, %s24, 0
        %s432 = smul.addr %s429, 16
        %s433 = sadd.s32 %s431, %s432
        %s434 = smul.addr %s427, 32
        %s435 = sadd.s32 %s433, %s434
        %s436 = smul.addr %s435, 8
        %s437 = scalar_lea.vmem %s3, %s436
      $region44: #{yolo_block.3} parent=39 // pred_fallthru
        _
    $region40: #{yolo_block.3} parent=5 // pred_fallthru
      _
  $region6: #{yolo_block.3} parent=0 // loop_footer
    %s13 = sadd.s32 1, %s9
  $region7: #{yolo_block.3} parent=0 // loop_footer_branch
    %8 = sbr.rel target = $region3
  $region8: #{yolo_block.3} parent=0 // loop_exit
    _

// kernel: yolo_block.2
$region0: #{yolo_block.2}
  #allocation0 [shape = 'u32[]', space=smem, size = 0x4, offset = 0x4, fixed_abs, tag = 'smem constant byte address 0x4 - core index']
  #allocation1 [shape = 'u32[144,128]{1,0:T(1,128)}', space=vmem, size = 0x12000, scoped, tag = 'internal scratch']
  #allocation2 [shape = 'f32[128,128]{1,0:T(8,128)}', space=vmem, size = 0x10000, scoped, tag = 'scratch operand']
  %s0 = inlined_call_operand.vmem [shape: bf16[2,2,10,16,12], index: 0, kind: input, shape index: {}]
  %s1 = inlined_call_operand.vmem [shape: bf16[3,12,128], index: 1, kind: input, shape index: {}]
  %s2 = inlined_call_operand.vmem [shape: f32[2,128,1], index: 2, kind: input, shape index: {}]
  %s3 = inlined_call_operand.vmem [shape: bf16[2,2,128,128], index: 3, kind: output, shape index: {0}]
  %s4 = inlined_call_operand.vmem [shape: f32[2,2,1,128], index: 4, kind: output, shape index: {1}]
  %s5 = inlined_call_operand.vmem [shape: f32[2,2,1,128], index: 5, kind: output, shape index: {2}]
  %6 = xla_tuple %s3, %s4, %s5
  %s7 = sld [smem:[#allocation0]]
  $region61: #{yolo_block.2} parent=0
    _
  %s9 = ssub.s32 1, %s7
  %s10 = scalar_select 0, %s9, %s7
  loop: start=0, step=1, limit=6
  $region2: #{yolo_block.2} parent=0 // loop_pre_header
    _
  $region3: #{yolo_block.2} parent=0 // loop_header
    %s12 = sphi 0, %s16
    %p13 = scmp.ge.s32.totalorder %s12, 6
    %s19 = sphi 0, %s38
    %s20 = sphi 0, %s34
    %s21 = sphi 0, %s30
    %s22 = sphi 0, %s19
    %s23 = sphi 0, %s20
    %s24 = sphi 0, %s21
    %s25 = sphi 0, %s22
    %s26 = sphi 0, %s23
    %s27 = sphi 0, %s24
    %s43 = sphi 0, %s45
    %s46 = sphi 0, %s43
    %s47 = sphi 0, %s46
    %s63 = sphi 0, %s47
    %s69 = sphi 0, %s71
    %s72 = sphi 0, %s69
    %s73 = sphi 0, %s72
    %s89 = sphi 0, %s73
    %s95 = sphi 0, %s97
    %s98 = sphi 0, %s95
    %s99 = sphi 0, %s98
    %s115 = sphi 0, %s99
    %s125 = sphi 0, %s127
    %s128 = sphi 0, %s125
    %s129 = sphi 0, %s128
    %s145 = sphi 0, %s129
    %s155 = sphi 0, %s157
    %s158 = sphi 0, %s155
    %s159 = sphi 0, %s158
    %s175 = sphi 0, %s159
    %s185 = sphi 0, %s187
    %s188 = sphi 0, %s185
    %s189 = sphi 0, %s188
    %s205 = sphi 0, %s189
  $region4: #{yolo_block.2} parent=0 // loop_header_branch
    %15 = sbr.rel (%p13) target = $region8
  $region5: #{yolo_block.2} parent=0 // loop_body
    %s17 = ssub.s32 %s12, 1
    %s18 = ssub.s32 %s12, 2
    %s28 = sadd.s32 1, %s21
    %p29 = scmp.ge.s32.totalorder %s28, 1
    %s30 = scalar_select %p29, 0, %s28
    %s31 = sadd.s32 1, %s20
    %s32 = scalar_select %p29, %s31, %s20
    %p33 = scmp.ge.s32.totalorder %s32, 2
    %s34 = scalar_select %p33, 0, %s32
    %s35 = sadd.s32 1, %s19
    %s36 = scalar_select %p33, %s35, %s19
    %p37 = scmp.ge.s32.totalorder %s36, 2
    %s38 = scalar_select %p37, 0, %s36
    %s39 = ssub.s32 %s19, %s38
    %s40 = ssub.s32 %s20, %s34
    %s41 = sor.u32 %s39, %s40
    %p42 = scmp.eq.s32.totalorder %s41, 0
    %s44 = sadd.s32 %s43, 1
    %s45 = scalar_select %p42, %s43, %s44
    %p48 = pneg %p42
    %p49 = scmp.eq.s32.totalorder %s12, 3
    %p50 = por %p48, %p49
    %p51 = scmp.ne.s32.totalorder %s43, %s46
    %p52 = scmp.eq.s32.totalorder %s12, 0
    %p53 = por %p51, %p52
    %p54 = scmp.ne.s32.totalorder %s43, %s46
    %p55 = scmp.eq.s32.totalorder %s17, 3
    %p56 = por %p54, %p55
    %p57 = scmp.ne.s32.totalorder %s46, %s47
    %p58 = scmp.eq.s32.totalorder %s17, 0
    %p59 = por %p57, %p58
    %p60 = scmp.ne.s32.totalorder %s46, %s47
    %p61 = scmp.eq.s32.totalorder %s18, 3
    %p62 = por %p60, %p61
    %p64 = scmp.ne.s32.totalorder %s47, %s63
    %p65 = scmp.eq.s32.totalorder %s18, 0
    %p66 = por %p64, %p65
    %s67 = ssub.s32 %s21, %s30
    %p68 = scmp.eq.s32.totalorder %s67, 0
    %s70 = sadd.s32 %s69, 1
    %s71 = scalar_select %p68, %s69, %s70
    %p74 = pneg %p68
    %p75 = scmp.eq.s32.totalorder %s12, 3
    %p76 = por %p74, %p75
    %p77 = scmp.ne.s32.totalorder %s69, %s72
    %p78 = scmp.eq.s32.totalorder %s12, 0
    %p79 = por %p77, %p78
    %p80 = scmp.ne.s32.totalorder %s69, %s72
    %p81 = scmp.eq.s32.totalorder %s17, 3
    %p82 = por %p80, %p81
    %p83 = scmp.ne.s32.totalorder %s72, %s73
    %p84 = scmp.eq.s32.totalorder %s17, 0
    %p85 = por %p83, %p84
    %p86 = scmp.ne.s32.totalorder %s72, %s73
    %p87 = scmp.eq.s32.totalorder %s18, 3
    %p88 = por %p86, %p87
    %p90 = scmp.ne.s32.totalorder %s73, %s89
    %p91 = scmp.eq.s32.totalorder %s18, 0
    %p92 = por %p90, %p91
    %s93 = ssub.s32 %s20, %s34
    %p94 = scmp.eq.s32.totalorder %s93, 0
    %s96 = sadd.s32 %s95, 1
    %s97 = scalar_select %p94, %s95, %s96
    %p100 = pneg %p94
    %p101 = scmp.eq.s32.totalorder %s12, 3
    %p102 = por %p100, %p101
    %p103 = scmp.ne.s32.totalorder %s95, %s98
    %p104 = scmp.eq.s32.totalorder %s12, 0
    %p105 = por %p103, %p104
    %p106 = scmp.ne.s32.totalorder %s95, %s98
    %p107 = scmp.eq.s32.totalorder %s17, 3
    %p108 = por %p106, %p107
    %p109 = scmp.ne.s32.totalorder %s98, %s99
    %p110 = scmp.eq.s32.totalorder %s17, 0
    %p111 = por %p109, %p110
    %p112 = scmp.ne.s32.totalorder %s98, %s99
    %p113 = scmp.eq.s32.totalorder %s18, 3
    %p114 = por %p112, %p113
    %p116 = scmp.ne.s32.totalorder %s99, %s115
    %p117 = scmp.eq.s32.totalorder %s18, 0
    %p118 = por %p116, %p117
    %s119 = ssub.s32 %s19, %s38
    %s120 = ssub.s32 %s20, %s34
    %s121 = sor.u32 %s119, %s120
    %s122 = ssub.s32 %s21, %s30
    %s123 = sor.u32 %s121, %s122
    %p124 = scmp.eq.s32.totalorder %s123, 0
    %s126 = sadd.s32 %s125, 1
    %s127 = scalar_select %p124, %s125, %s126
    %p130 = pneg %p124
    %p131 = scmp.eq.s32.totalorder %s12, 3
    %p132 = por %p130, %p131
    %p133 = scmp.ne.s32.totalorder %s125, %s128
    %p134 = scmp.eq.s32.totalorder %s12, 0
    %p135 = por %p133, %p134
    %p136 = scmp.ne.s32.totalorder %s125, %s128
    %p137 = scmp.eq.s32.totalorder %s17, 3
    %p138 = por %p136, %p137
    %p139 = scmp.ne.s32.totalorder %s128, %s129
    %p140 = scmp.eq.s32.totalorder %s17, 0
    %p141 = por %p139, %p140
    %p142 = scmp.ne.s32.totalorder %s128, %s129
    %p143 = scmp.eq.s32.totalorder %s18, 3
    %p144 = por %p142, %p143
    %p146 = scmp.ne.s32.totalorder %s129, %s145
    %p147 = scmp.eq.s32.totalorder %s18, 0
    %p148 = por %p146, %p147
    %s149 = ssub.s32 %s19, %s38
    %s150 = ssub.s32 %s20, %s34
    %s151 = sor.u32 %s149, %s150
    %s152 = ssub.s32 %s21, %s30
    %s153 = sor.u32 %s151, %s152
    %p154 = scmp.eq.s32.totalorder %s153, 0
    %s156 = sadd.s32 %s155, 1
    %s157 = scalar_select %p154, %s155, %s156
    %p160 = pneg %p154
    %p161 = scmp.eq.s32.totalorder %s12, 3
    %p162 = por %p160, %p161
    %p163 = scmp.ne.s32.totalorder %s155, %s158
    %p164 = scmp.eq.s32.totalorder %s12, 0
    %p165 = por %p163, %p164
    %p166 = scmp.ne.s32.totalorder %s155, %s158
    %p167 = scmp.eq.s32.totalorder %s17, 3
    %p168 = por %p166, %p167
    %p169 = scmp.ne.s32.totalorder %s158, %s159
    %p170 = scmp.eq.s32.totalorder %s17, 0
    %p171 = por %p169, %p170
    %p172 = scmp.ne.s32.totalorder %s158, %s159
    %p173 = scmp.eq.s32.totalorder %s18, 3
    %p174 = por %p172, %p173
    %p176 = scmp.ne.s32.totalorder %s159, %s175
    %p177 = scmp.eq.s32.totalorder %s18, 0
    %p178 = por %p176, %p177
    %s179 = ssub.s32 %s19, %s38
    %s180 = ssub.s32 %s20, %s34
    %s181 = sor.u32 %s179, %s180
    %s182 = ssub.s32 %s21, %s30
    %s183 = sor.u32 %s181, %s182
    %p184 = scmp.eq.s32.totalorder %s183, 0
    %s186 = sadd.s32 %s185, 1
    %s187 = scalar_select %p184, %s185, %s186
    %p190 = pneg %p184
    %p191 = scmp.eq.s32.totalorder %s12, 3
    %p192 = por %p190, %p191
    %p193 = scmp.ne.s32.totalorder %s185, %s188
    %p194 = scmp.eq.s32.totalorder %s12, 0
    %p195 = por %p193, %p194
    %p196 = scmp.ne.s32.totalorder %s185, %s188
    %p197 = scmp.eq.s32.totalorder %s17, 3
    %p198 = por %p196, %p197
    %p199 = scmp.ne.s32.totalorder %s188, %s189
    %p200 = scmp.eq.s32.totalorder %s17, 0
    %p201 = por %p199, %p200
    %p202 = scmp.ne.s32.totalorder %s188, %s189
    %p203 = scmp.eq.s32.totalorder %s18, 3
    %p204 = por %p202, %p203
    %p206 = scmp.ne.s32.totalorder %s189, %s205
    %p207 = scmp.eq.s32.totalorder %s18, 0
    %p208 = por %p206, %p207
    %p209 = scmp.le.s32.totalorder 1, %s12
    %p210 = scmp.lt.s32.totalorder %s12, 5
    %p211 = pnand %p209, %p210
    %p212 = pneg %p211
    // Predicated region
    $region9: #{yolo_block.2} parent=5 // pred_check
      _
    $region10: #{yolo_block.2} parent=5 // pred_check_branch
      %214 = sbr.rel (%p211) target = $region12
    $region11: #{yolo_block.2} parent=5 // pred_region
      %s215 = ssub.s32 %s12, 1
      // Predicated region
      $region13: #{yolo_block.2} parent=11 // pred_check
        %p216 = pneg %p85
      $region14: #{yolo_block.2} parent=11 // pred_check_branch
        %218 = sbr.rel (%p216) target = $region16
      $region15: #{yolo_block.2} parent=11 // pred_region
        %p219 = scmp.lt.s32.totalorder %s24, 0
        %s220 = scalar_select %p219, %s24, 0
        %s221 = smul.addr %s220, 4
        %s222 = scalar_lea.vmem %s1, %s221
      $region16: #{yolo_block.2} parent=11 // pred_fallthru
        _
    $region12: #{yolo_block.2} parent=5 // pred_fallthru
      _
    %p223 = scmp.lt.s32.totalorder %s12, 4
    // Predicated region
    $region17: #{yolo_block.2} parent=5 // pred_check
      %p224 = pneg %p223
    $region18: #{yolo_block.2} parent=5 // pred_check_branch
      %226 = sbr.rel (%p224) target = $region20
    $region19: #{yolo_block.2} parent=5 // pred_region
      // Predicated region
      $region21: #{yolo_block.2} parent=19 // pred_check
        %p227 = pneg %p53
      $region22: #{yolo_block.2} parent=19 // pred_check_branch
        %229 = sbr.rel (%p227) target = $region24
      $region23: #{yolo_block.2} parent=19 // pred_region
        %p230 = scmp.lt.s32.totalorder %s19, 1
        %s231 = scalar_select %p230, %s19, 1
        %p232 = scmp.lt.s32.totalorder %s20, 1
        %s233 = scalar_select %p232, %s20, 1
        %s234 = smul.addr %s233, 20
        %s235 = smul.addr %s231, 40
        %s236 = sadd.s32 %s234, %s235
        %s237 = smul.addr %s236, 4
        %s238 = scalar_lea.vmem %s0, %s237
      $region24: #{yolo_block.2} parent=19 // pred_fallthru
        _
      // Predicated region
      $region25: #{yolo_block.2} parent=19 // pred_check
        %p239 = pneg %p105
      $region26: #{yolo_block.2} parent=19 // pred_check_branch
        %241 = sbr.rel (%p239) target = $region28
      $region27: #{yolo_block.2} parent=19 // pred_region
        %p242 = scmp.lt.s32.totalorder %s20, 1
        %s243 = scalar_select %p242, %s20, 1
        %s244 = smul.addr %s243, 16
        %s245 = smul.addr %s244, 8
        %s246 = scalar_lea.vmem %s2, %s245
      $region28: #{yolo_block.2} parent=19 // pred_fallthru
        _
    $region20: #{yolo_block.2} parent=5 // pred_fallthru
      _
    %p247 = scmp.le.s32.totalorder 1, %s12
    %p248 = scmp.lt.s32.totalorder %s12, 5
    %p249 = pnand %p247, %p248
    %p250 = pneg %p249
    // Predicated region
    $region29: #{yolo_block.2} parent=5 // pred_check
      _
    $region30: #{yolo_block.2} parent=5 // pred_check_branch
      %252 = sbr.rel (%p249) target = $region32
    $region31: #{yolo_block.2} parent=5 // pred_region
      %s253 = ssub.s32 %s12, 1
      %p254 = scmp.lt.s32.totalorder %s22, 1
      %s255 = scalar_select %p254, %s22, 1
      %p256 = scmp.lt.s32.totalorder %s23, 1
      %s257 = scalar_select %p256, %s23, 1
      %s258 = smul.addr %s257, 20
      %s259 = smul.addr %s255, 40
      %s260 = sadd.s32 %s258, %s259
      %s261 = smul.addr %s260, 4
      %s262 = scalar_lea.vmem %s0, %s261
      %p263 = pneg %p59
      %p264 = pneg %p56
      %p265 = scmp.lt.s32.totalorder %s24, 0
      %s266 = scalar_select %p265, %s24, 0
      %s267 = smul.addr %s266, 4
      %s268 = scalar_lea.vmem %s1, %s267
      %p269 = pneg %p85
      %p270 = pneg %p82
      %p271 = scmp.lt.s32.totalorder %s23, 1
      %s272 = scalar_select %p271, %s23, 1
      %s273 = smul.addr %s272, 16
      %s274 = smul.addr %s273, 8
      %s275 = scalar_lea.vmem %s2, %s274
      %p276 = pneg %p111
      %p277 = pneg %p108
      %p278 = pneg %p141
      %p279 = pneg %p138
      %p280 = scmp.lt.s32.totalorder %s22, 1
      %s281 = scalar_select %p280, %s22, 1
      %p282 = scmp.lt.s32.totalorder %s23, 1
      %s283 = scalar_select %p282, %s23, 1
      %p284 = scmp.lt.s32.totalorder %s24, 0
      %s285 = scalar_select %p284, %s24, 0
      %s286 = smul.addr %s283, 16
      %s287 = sadd.s32 %s285, %s286
      %s288 = smul.addr %s281, 32
      %s289 = sadd.s32 %s287, %s288
      %s290 = smul.addr %s289, 4
      %s291 = scalar_lea.vmem %s3, %s290
      %p292 = pneg %p171
      %p293 = pneg %p168
      %p294 = scmp.lt.s32.totalorder %s22, 1
      %s295 = scalar_select %p294, %s22, 1
      %p296 = scmp.lt.s32.totalorder %s23, 1
      %s297 = scalar_select %p296, %s23, 1
      %p298 = scmp.lt.s32.totalorder %s24, 0
      %s299 = scalar_select %p298, %s24, 0
      %s300 = sadd.s32 %s299, %s297
      %s301 = smul.addr %s295, 2
      %s302 = sadd.s32 %s300, %s301
      %s303 = scalar_lea.vmem %s4, %s302
      %p304 = pneg %p201
      %p305 = pneg %p198
      %p306 = scmp.lt.s32.totalorder %s22, 1
      %s307 = scalar_select %p306, %s22, 1
      %p308 = scmp.lt.s32.totalorder %s23, 1
      %s309 = scalar_select %p308, %s23, 1
      %p310 = scmp.lt.s32.totalorder %s24, 0
      %s311 = scalar_select %p310, %s24, 0
      %s312 = sadd.s32 %s311, %s309
      %s313 = smul.addr %s307, 2
      %s314 = sadd.s32 %s312, %s313
      %s315 = scalar_lea.vmem %s5, %s314
      %p316 = scmp.lt.s32.totalorder %s22, 1
      %s317 = scalar_select %p316, %s22, 1
      %p318 = scmp.lt.s32.totalorder %s23, 1
      %s319 = scalar_select %p318, %s23, 1
      %s320 = smul.addr %s319, 20
      %s321 = smul.addr %s317, 40
      %s322 = sadd.s32 %s320, %s321
      %s323 = smul.addr %s322, 4
      %s324 = scalar_lea.vmem %s0, %s323
      %p325 = scmp.lt.s32.totalorder %s24, 0
      %s326 = scalar_select %p325, %s24, 0
      %s327 = smul.addr %s326, 4
      %s328 = scalar_lea.vmem %s1, %s327
      %p329 = scmp.lt.s32.totalorder %s23, 1
      %s330 = scalar_select %p329, %s23, 1
      %s331 = smul.addr %s330, 16
      %s332 = smul.addr %s331, 8
      %s333 = scalar_lea.vmem %s2, %s332
      %p334 = scmp.lt.s32.totalorder %s22, 1
      %s335 = scalar_select %p334, %s22, 1
      %p336 = scmp.lt.s32.totalorder %s23, 1
      %s337 = scalar_select %p336, %s23, 1
      %p338 = scmp.lt.s32.totalorder %s24, 0
      %s339 = scalar_select %p338, %s24, 0
      %s340 = smul.addr %s337, 16
      %s341 = sadd.s32 %s339, %s340
      %s342 = smul.addr %s335, 32
      %s343 = sadd.s32 %s341, %s342
      %s344 = smul.addr %s343, 4
      %s345 = scalar_lea.vmem %s3, %s344
      %p346 = scmp.lt.s32.totalorder %s22, 1
      %s347 = scalar_select %p346, %s22, 1
      %p348 = scmp.lt.s32.totalorder %s23, 1
      %s349 = scalar_select %p348, %s23, 1
      %p350 = scmp.lt.s32.totalorder %s24, 0
      %s351 = scalar_select %p350, %s24, 0
      %s352 = sadd.s32 %s351, %s349
      %s353 = smul.addr %s347, 2
      %s354 = sadd.s32 %s352, %s353
      %s355 = scalar_lea.vmem %s4, %s354
      %p356 = scmp.lt.s32.totalorder %s22, 1
      %s357 = scalar_select %p356, %s22, 1
      %p358 = scmp.lt.s32.totalorder %s23, 1
      %s359 = scalar_select %p358, %s23, 1
      %p360 = scmp.lt.s32.totalorder %s24, 0
      %s361 = scalar_select %p360, %s24, 0
      %s362 = sadd.s32 %s361, %s359
      %s363 = smul.addr %s357, 2
      %s364 = sadd.s32 %s362, %s363
      %s365 = scalar_lea.vmem %s5, %s364
      %v367 = vld [vmem:[%s324] sm:$0xf]
      %v368 = vld [vmem:[%s324 + $0x4] sm:$0xf]
      %v369 = vld [vmem:[%s324 + $0x8] sm:$0xf]
      %v370 = vld [vmem:[%s324 + $0xc] sm:$0xf]
      %v371 = vld [vmem:[%s324 + $0x10] sm:$0xf]
      %v372 = vld [vmem:[%s324 + $0x14] sm:$0xf]
      %v373 = vld [vmem:[%s324 + $0x18] sm:$0xf]
      %v374 = vld [vmem:[%s324 + $0x1c] sm:$0xf]
      %v375 = vld [vmem:[%s324 + $0x20] sm:$0xf]
      %v376 = vld [vmem:[%s324 + $0x24] sm:$0xf]
      %v377 = vld [vmem:[%s324 + $0x28] sm:$0xf]
      %v378 = vld [vmem:[%s324 + $0x2c] sm:$0xf]
      %v379 = vld [vmem:[%s324 + $0x30] sm:$0xf]
      %v380 = vld [vmem:[%s324 + $0x34] sm:$0xf]
      %v381 = vld [vmem:[%s324 + $0x38] sm:$0xf]
      %v382 = vld [vmem:[%s324 + $0x3c] sm:$0xf]
      %v383 = vld [vmem:[%s328] sm:$0xf]
      %v384 = vld [vmem:[%s328 + $0x4] sm:$0x3]
      %v401 = vunpack.c.l.b16 %v367
      %v402 = vunpack.c.l.b16 %v368
      %v403 = vunpack.c.l.b16 %v369
      %v404 = vunpack.c.l.b16 %v370
      %v405 = vunpack.c.l.b16 %v371
      %v406 = vunpack.c.l.b16 %v372
      %v407 = vunpack.c.l.b16 %v373
      %v408 = vunpack.c.l.b16 %v374
      %v409 = vunpack.c.l.b16 %v375
      %v410 = vunpack.c.l.b16 %v376
      %v411 = vunpack.c.l.b16 %v377
      %v412 = vunpack.c.l.b16 %v378
      %v413 = vunpack.c.l.b16 %v379
      %v414 = vunpack.c.l.b16 %v380
      %v415 = vunpack.c.l.b16 %v381
      %v416 = vunpack.c.l.b16 %v382
      %v417 = vpack.c.b16 %v402, %v401
      %v418 = vpack.c.b16 %v404, %v403
      %v419 = vpack.c.b16 %v406, %v405
      %v420 = vpack.c.b16 %v408, %v407
      %v421 = vpack.c.b16 %v410, %v409
      %v422 = vpack.c.b16 %v412, %v411
      %v423 = vpack.c.b16 %v414, %v413
      %v424 = vpack.c.b16 %v416, %v415
      %v427 = vunpack.c.l.b16 %v383
      %v428 = vunpack.c.l.b16 %v384
      %v429 = vpack.c.b16 %v428, %v427
      %vm430 = vcmask 97280
      %v432 = vsel %vm430, %v417, 0
      %v435 = vsel %vm430, %v418, 0
      %v438 = vsel %vm430, %v419, 0
      %v441 = vsel %vm430, %v420, 0
      %v444 = vsel %vm430, %v421, 0
      %v447 = vsel %vm430, %v422, 0
      %v450 = vsel %vm430, %v423, 0
      %v453 = vsel %vm430, %v424, 0
      %vm455 = vcmask 1045504
      %v457 = vsel %vm455, %v429, 0
      %459 = vmatprep.subr.bf16.mxu0 0
      %460 = vmatpush1.bf16.msra.mxu0 0
      %461 = vmatprep.subr.bf16.mxu0 0
      %462 = vmatpush1.bf16.msra.mxu0 0
      %463 = vmatprep.subr.bf16.mxu0 0
      %464 = vmatpush1.bf16.msra.mxu0 0
      %465 = vmatprep.subr.bf16.mxu0 0
      %466 = vmatpush1.bf16.msra.mxu0 0
      %467 = vmatprep.subr.bf16.mxu0 0
      %468 = vmatpush1.bf16.msra.mxu0 0
      %469 = vmatprep.subr.bf16.mxu0 0
      %470 = vmatpush1.bf16.msra.mxu0 0
      %471 = vmatprep.subr.bf16.mxu0 0
      %472 = vmatpush1.bf16.msra.mxu0 0
      %473 = vmatprep.subr.bf16.mxu0 0
      %474 = vmatpush1.bf16.msra.mxu0 %v457
      %475 = vmatprep.subr.bf16.mxu0 0
      %476 = vmatpush2.bf16.msra.mxu0 0
      %477 = vmatprep.subr.bf16.mxu0 0
      %478 = vmatpush2.bf16.msra.mxu0 0
      %479 = vmatprep.subr.bf16.mxu0 0
      %480 = vmatpush2.bf16.msra.mxu0 0
      %481 = vmatprep.subr.bf16.mxu0 0
      %482 = vmatpush2.bf16.msra.mxu0 0
      %483 = vmatprep.subr.bf16.mxu0 0
      %484 = vmatpush2.bf16.msra.mxu0 0
      %485 = vmatprep.subr.bf16.mxu0 0
      %486 = vmatpush2.bf16.msra.mxu0 0
      %487 = vmatprep.subr.bf16.mxu0 0
      %488 = vmatpush2.bf16.msra.mxu0 0
      %489 = vmatprep.subr.bf16.mxu0 0
      %490 = vmatpush2.bf16.msra.mxu0 0
      %491 = vmatprep.mubr.bf16.mxu0 0
      %492 = vmatmul.mubr.bf16.gmra.mxu0 %v432
      %v493 = vpop.f32.mrf.mxu0
      %v494 = vadd.f32 0.0, %v493
      %v495 = vpop.f32.mrf.mxu0
      %v496 = vpop.f32.mrf.mxu0
      %v497 = vadd.f32 0.0, %v496
      %v498 = vpop.f32.mrf.mxu0
      %499 = vmatprep.mubr.bf16.mxu0 0
      %500 = vmatmul.mubr.bf16.gmra.mxu0 %v435
      %v501 = vpop.f32.mrf.mxu0
      %v502 = vadd.f32 0.0, %v501
      %v503 = vpop.f32.mrf.mxu0
      %v504 = vpop.f32.mrf.mxu0
      %v505 = vadd.f32 0.0, %v504
      %v506 = vpop.f32.mrf.mxu0
      %507 = vmatprep.mubr.bf16.mxu0 0
      %508 = vmatmul.mubr.bf16.gmra.mxu0 %v438
      %v509 = vpop.f32.mrf.mxu0
      %v510 = vadd.f32 0.0, %v509
      %v511 = vpop.f32.mrf.mxu0
      %v512 = vpop.f32.mrf.mxu0
      %v513 = vadd.f32 0.0, %v512
      %v514 = vpop.f32.mrf.mxu0
      %515 = vmatprep.mubr.bf16.mxu0 0
      %516 = vmatmul.mubr.bf16.gmra.mxu0 %v441
      %v517 = vpop.f32.mrf.mxu0
      %v518 = vadd.f32 0.0, %v517
      %v519 = vpop.f32.mrf.mxu0
      %v520 = vpop.f32.mrf.mxu0
      %v521 = vadd.f32 0.0, %v520
      %v522 = vpop.f32.mrf.mxu0
      %523 = vmatprep.mubr.bf16.mxu0 0
      %524 = vmatmul.mubr.bf16.gmra.mxu0 %v444
      %v525 = vpop.f32.mrf.mxu0
      %v526 = vadd.f32 0.0, %v525
      %v527 = vpop.f32.mrf.mxu0
      %v528 = vpop.f32.mrf.mxu0
      %v529 = vadd.f32 0.0, %v528
      %v530 = vpop.f32.mrf.mxu0
      %531 = vmatprep.mubr.bf16.mxu0 0
      %532 = vmatmul.mubr.bf16.gmra.mxu0 %v447
      %v533 = vpop.f32.mrf.mxu0
      %v534 = vadd.f32 0.0, %v533
      %v535 = vpop.f32.mrf.mxu0
      %v536 = vpop.f32.mrf.mxu0
      %v537 = vadd.f32 0.0, %v536
      %v538 = vpop.f32.mrf.mxu0
      %539 = vmatprep.mubr.bf16.mxu0 0
      %540 = vmatmul.mubr.bf16.gmra.mxu0 %v450
      %v541 = vpop.f32.mrf.mxu0
      %v542 = vadd.f32 0.0, %v541
      %v543 = vpop.f32.mrf.mxu0
      %v544 = vpop.f32.mrf.mxu0
      %v545 = vadd.f32 0.0, %v544
      %v546 = vpop.f32.mrf.mxu0
      %547 = vmatprep.mubr.bf16.mxu0 0
      %548 = vmatmul.mubr.bf16.gmra.mxu0 %v453
      %v549 = vpop.f32.mrf.mxu0
      %v550 = vadd.f32 0.0, %v549
      %v551 = vpop.f32.mrf.mxu0
      %v552 = vpop.f32.mrf.mxu0
      %v553 = vadd.f32 0.0, %v552
      %v554 = vpop.f32.mrf.mxu0
      %555 = vdwg.mxu0
      %556 = vst [vmem:[#allocation2] sm:$0xff] %v494
      %557 = vst [vmem:[#allocation2 + $0x8] sm:$0xff] %v497
      %558 = vst [vmem:[#allocation2 + $0x10] sm:$0xff] %v502
      %559 = vst [vmem:[#allocation2 + $0x18] sm:$0xff] %v505
      %560 = vst [vmem:[#allocation2 + $0x20] sm:$0xff] %v510
      %561 = vst [vmem:[#allocation2 + $0x28] sm:$0xff] %v513
      %562 = vst [vmem:[#allocation2 + $0x30] sm:$0xff] %v518
      %563 = vst [vmem:[#allocation2 + $0x38] sm:$0xff] %v521
      %564 = vst [vmem:[#allocation2 + $0x40] sm:$0xff] %v526
      %565 = vst [vmem:[#allocation2 + $0x48] sm:$0xff] %v529
      %566 = vst [vmem:[#allocation2 + $0x50] sm:$0xff] %v534
      %567 = vst [vmem:[#allocation2 + $0x58] sm:$0xff] %v537
      %568 = vst [vmem:[#allocation2 + $0x60] sm:$0xff] %v542
      %569 = vst [vmem:[#allocation2 + $0x68] sm:$0xff] %v545
      %570 = vst [vmem:[#allocation2 + $0x70] sm:$0xff] %v550
      %571 = vst [vmem:[#allocation2 + $0x78] sm:$0xff] %v553
      %s572 = scalar_lea.vmem %s324, 8
      %v573 = vld [vmem:[%s572] sm:$0xf]
      %v574 = vld [vmem:[%s572 + $0x4] sm:$0xf]
      %v575 = vld [vmem:[%s572 + $0x8] sm:$0xf]
      %v576 = vld [vmem:[%s572 + $0xc] sm:$0xf]
      %v577 = vld [vmem:[%s572 + $0x10] sm:$0xf]
      %v578 = vld [vmem:[%s572 + $0x14] sm:$0xf]
      %v579 = vld [vmem:[%s572 + $0x18] sm:$0xf]
      %v580 = vld [vmem:[%s572 + $0x1c] sm:$0xf]
      %v581 = vld [vmem:[%s572 + $0x20] sm:$0xf]
      %v582 = vld [vmem:[%s572 + $0x24] sm:$0xf]
      %v583 = vld [vmem:[%s572 + $0x28] sm:$0xf]
      %v584 = vld [vmem:[%s572 + $0x2c] sm:$0xf]
      %v585 = vld [vmem:[%s572 + $0x30] sm:$0xf]
      %v586 = vld [vmem:[%s572 + $0x34] sm:$0xf]
      %v587 = vld [vmem:[%s572 + $0x38] sm:$0xf]
      %v588 = vld [vmem:[%s572 + $0x3c] sm:$0xf]
      %s589 = scalar_lea.vmem %s328, 8
      %v590 = vld [vmem:[%s589] sm:$0xf]
      %v591 = vld [vmem:[%s589 + $0x4] sm:$0x3]
      %v608 = vunpack.c.l.b16 %v573
      %v609 = vunpack.c.l.b16 %v574
      %v610 = vunpack.c.l.b16 %v575
      %v611 = vunpack.c.l.b16 %v576
      %v612 = vunpack.c.l.b16 %v577
      %v613 = vunpack.c.l.b16 %v578
      %v614 = vunpack.c.l.b16 %v579
      %v615 = vunpack.c.l.b16 %v580
      %v616 = vunpack.c.l.b16 %v581
      %v617 = vunpack.c.l.b16 %v582
      %v618 = vunpack.c.l.b16 %v583
      %v619 = vunpack.c.l.b16 %v584
      %v620 = vunpack.c.l.b16 %v585
      %v621 = vunpack.c.l.b16 %v586
      %v622 = vunpack.c.l.b16 %v587
      %v623 = vunpack.c.l.b16 %v588
      %v624 = vpack.c.b16 %v609, %v608
      %v625 = vpack.c.b16 %v611, %v610
      %v626 = vpack.c.b16 %v613, %v612
      %v627 = vpack.c.b16 %v615, %v614
      %v628 = vpack.c.b16 %v617, %v616
      %v629 = vpack.c.b16 %v619, %v618
      %v630 = vpack.c.b16 %v621, %v620
      %v631 = vpack.c.b16 %v623, %v622
      %v634 = vunpack.c.l.b16 %v590
      %v635 = vunpack.c.l.b16 %v591
      %v636 = vpack.c.b16 %v635, %v634
      %v638 = vsel %vm430, %v624, 0
      %v641 = vsel %vm430, %v625, 0
      %v644 = vsel %vm430, %v626, 0
      %v647 = vsel %vm430, %v627, 0
      %v650 = vsel %vm430, %v628, 0
      %v653 = vsel %vm430, %v629, 0
      %v656 = vsel %vm430, %v630, 0
      %v659 = vsel %vm430, %v631, 0
      %v662 = vsel %vm455, %v636, 0
      %664 = vmatprep.subr.bf16.mxu0 0
      %665 = vmatpush1.bf16.msra.mxu0 0
      %666 = vmatprep.subr.bf16.mxu0 0
      %667 = vmatpush1.bf16.msra.mxu0 0
      %668 = vmatprep.subr.bf16.mxu0 0
      %669 = vmatpush1.bf16.msra.mxu0 0
      %670 = vmatprep.subr.bf16.mxu0 0
      %671 = vmatpush1.bf16.msra.mxu0 0
      %672 = vmatprep.subr.bf16.mxu0 0
      %673 = vmatpush1.bf16.msra.mxu0 0
      %674 = vmatprep.subr.bf16.mxu0 0
      %675 = vmatpush1.bf16.msra.mxu0 0
      %676 = vmatprep.subr.bf16.mxu0 0
      %677 = vmatpush1.bf16.msra.mxu0 0
      %678 = vmatprep.subr.bf16.mxu0 0
      %679 = vmatpush1.bf16.msra.mxu0 %v662
      %680 = vmatprep.subr.bf16.mxu0 0
      %681 = vmatpush2.bf16.msra.mxu0 0
      %682 = vmatprep.subr.bf16.mxu0 0
      %683 = vmatpush2.bf16.msra.mxu0 0
      %684 = vmatprep.subr.bf16.mxu0 0
      %685 = vmatpush2.bf16.msra.mxu0 0
      %686 = vmatprep.subr.bf16.mxu0 0
      %687 = vmatpush2.bf16.msra.mxu0 0
      %688 = vmatprep.subr.bf16.mxu0 0
      %689 = vmatpush2.bf16.msra.mxu0 0
      %690 = vmatprep.subr.bf16.mxu0 0
      %691 = vmatpush2.bf16.msra.mxu0 0
      %692 = vmatprep.subr.bf16.mxu0 0
      %693 = vmatpush2.bf16.msra.mxu0 0
      %694 = vmatprep.subr.bf16.mxu0 0
      %695 = vmatpush2.bf16.msra.mxu0 0
      %696 = vmatprep.mubr.bf16.mxu0 0
      %697 = vmatmul.mubr.bf16.gmra.mxu0 %v638
      %v698 = vpop.f32.mrf.mxu0
      %v699 = vadd.f32 0.0, %v698
      %v700 = vpop.f32.mrf.mxu0
      %v701 = vpop.f32.mrf.mxu0
      %v702 = vadd.f32 0.0, %v701
      %v703 = vpop.f32.mrf.mxu0
      %704 = vmatprep.mubr.bf16.mxu0 0
      %705 = vmatmul.mubr.bf16.gmra.mxu0 %v641
      %v706 = vpop.f32.mrf.mxu0
      %v707 = vadd.f32 0.0, %v706
      %v708 = vpop.f32.mrf.mxu0
      %v709 = vpop.f32.mrf.mxu0
      %v710 = vadd.f32 0.0, %v709
      %v711 = vpop.f32.mrf.mxu0
      %712 = vmatprep.mubr.bf16.mxu0 0
      %713 = vmatmul.mubr.bf16.gmra.mxu0 %v644
      %v714 = vpop.f32.mrf.mxu0
      %v715 = vadd.f32 0.0, %v714
      %v716 = vpop.f32.mrf.mxu0
      %v717 = vpop.f32.mrf.mxu0
      %v718 = vadd.f32 0.0, %v717
      %v719 = vpop.f32.mrf.mxu0
      %720 = vmatprep.mubr.bf16.mxu0 0
      %721 = vmatmul.mubr.bf16.gmra.mxu0 %v647
      %v722 = vpop.f32.mrf.mxu0
      %v723 = vadd.f32 0.0, %v722
      %v724 = vpop.f32.mrf.mxu0
      %v725 = vpop.f32.mrf.mxu0
      %v726 = vadd.f32 0.0, %v725
      %v727 = vpop.f32.mrf.mxu0
      %728 = vmatprep.mubr.bf16.mxu0 0
      %729 = vmatmul.mubr.bf16.gmra.mxu0 %v650
      %v730 = vpop.f32.mrf.mxu0
      %v731 = vadd.f32 0.0, %v730
      %v732 = vpop.f32.mrf.mxu0
      %v733 = vpop.f32.mrf.mxu0
      %v734 = vadd.f32 0.0, %v733
      %v735 = vpop.f32.mrf.mxu0
      %736 = vmatprep.mubr.bf16.mxu0 0
      %737 = vmatmul.mubr.bf16.gmra.mxu0 %v653
      %v738 = vpop.f32.mrf.mxu0
      %v739 = vadd.f32 0.0, %v738
      %v740 = vpop.f32.mrf.mxu0
      %v741 = vpop.f32.mrf.mxu0
      %v742 = vadd.f32 0.0, %v741
      %v743 = vpop.f32.mrf.mxu0
      %744 = vmatprep.mubr.bf16.mxu0 0
      %745 = vmatmul.mubr.bf16.gmra.mxu0 %v656
      %v746 = vpop.f32.mrf.mxu0
      %v747 = vadd.f32 0.0, %v746
      %v748 = vpop.f32.mrf.mxu0
      %v749 = vpop.f32.mrf.mxu0
      %v750 = vadd.f32 0.0, %v749
      %v751 = vpop.f32.mrf.mxu0
      %752 = vmatprep.mubr.bf16.mxu0 0
      %753 = vmatmul.mubr.bf16.gmra.mxu0 %v659
      %v754 = vpop.f32.mrf.mxu0
      %v755 = vadd.f32 0.0, %v754
      %v756 = vpop.f32.mrf.mxu0
      %v757 = vpop.f32.mrf.mxu0
      %v758 = vadd.f32 0.0, %v757
      %v759 = vpop.f32.mrf.mxu0
      %760 = vdwg.mxu0
      %v761 = vld [vmem:[#allocation2] sm:$0xff]
      %v762 = vld [vmem:[#allocation2 + $0x8] sm:$0xff]
      %v763 = vld [vmem:[#allocation2 + $0x10] sm:$0xff]
      %v764 = vld [vmem:[#allocation2 + $0x18] sm:$0xff]
      %v765 = vld [vmem:[#allocation2 + $0x20] sm:$0xff]
      %v766 = vld [vmem:[#allocation2 + $0x28] sm:$0xff]
      %v767 = vld [vmem:[#allocation2 + $0x30] sm:$0xff]
      %v768 = vld [vmem:[#allocation2 + $0x38] sm:$0xff]
      %v769 = vld [vmem:[#allocation2 + $0x40] sm:$0xff]
      %v770 = vld [vmem:[#allocation2 + $0x48] sm:$0xff]
      %v771 = vld [vmem:[#allocation2 + $0x50] sm:$0xff]
      %v772 = vld [vmem:[#allocation2 + $0x58] sm:$0xff]
      %v773 = vld [vmem:[#allocation2 + $0x60] sm:$0xff]
      %v774 = vld [vmem:[#allocation2 + $0x68] sm:$0xff]
      %v775 = vld [vmem:[#allocation2 + $0x70] sm:$0xff]
      %v776 = vld [vmem:[#allocation2 + $0x78] sm:$0xff]
      %v777 = vadd.f32 %v761, %v699
      %v778 = vadd.f32 %v762, %v702
      %v779 = vadd.f32 %v763, %v707
      %v780 = vadd.f32 %v764, %v710
      %v781 = vadd.f32 %v765, %v715
      %v782 = vadd.f32 %v766, %v718
      %v783 = vadd.f32 %v767, %v723
      %v784 = vadd.f32 %v768, %v726
      %v785 = vadd.f32 %v769, %v731
      %v786 = vadd.f32 %v770, %v734
      %v787 = vadd.f32 %v771, %v739
      %v788 = vadd.f32 %v772, %v742
      %v789 = vadd.f32 %v773, %v747
      %v790 = vadd.f32 %v774, %v750
      %v791 = vadd.f32 %v775, %v755
      %v792 = vadd.f32 %v776, %v758
      %793 = vst [vmem:[#allocation2] sm:$0xff] %v777
      %794 = vst [vmem:[#allocation2 + $0x8] sm:$0xff] %v778
      %795 = vst [vmem:[#allocation2 + $0x10] sm:$0xff] %v779
      %796 = vst [vmem:[#allocation2 + $0x18] sm:$0xff] %v780
      %797 = vst [vmem:[#allocation2 + $0x20] sm:$0xff] %v781
      %798 = vst [vmem:[#allocation2 + $0x28] sm:$0xff] %v782
      %799 = vst [vmem:[#allocation2 + $0x30] sm:$0xff] %v783
      %800 = vst [vmem:[#allocation2 + $0x38] sm:$0xff] %v784
      %801 = vst [vmem:[#allocation2 + $0x40] sm:$0xff] %v785
      %802 = vst [vmem:[#allocation2 + $0x48] sm:$0xff] %v786
      %803 = vst [vmem:[#allocation2 + $0x50] sm:$0xff] %v787
      %804 = vst [vmem:[#allocation2 + $0x58] sm:$0xff] %v788
      %805 = vst [vmem:[#allocation2 + $0x60] sm:$0xff] %v789
      %806 = vst [vmem:[#allocation2 + $0x68] sm:$0xff] %v790
      %807 = vst [vmem:[#allocation2 + $0x70] sm:$0xff] %v791
      %808 = vst [vmem:[#allocation2 + $0x78] sm:$0xff] %v792
      %s809 = scalar_lea.vmem %s324, 16
      %v810 = vld [vmem:[%s809] sm:$0xf]
      %v811 = vld [vmem:[%s809 + $0x4] sm:$0xf]
      %v812 = vld [vmem:[%s809 + $0x8] sm:$0xf]
      %v813 = vld [vmem:[%s809 + $0xc] sm:$0xf]
      %v814 = vld [vmem:[%s809 + $0x10] sm:$0xf]
      %v815 = vld [vmem:[%s809 + $0x14] sm:$0xf]
      %v816 = vld [vmem:[%s809 + $0x18] sm:$0xf]
      %v817 = vld [vmem:[%s809 + $0x1c] sm:$0xf]
      %v818 = vld [vmem:[%s809 + $0x20] sm:$0xf]
      %v819 = vld [vmem:[%s809 + $0x24] sm:$0xf]
      %v820 = vld [vmem:[%s809 + $0x28] sm:$0xf]
      %v821 = vld [vmem:[%s809 + $0x2c] sm:$0xf]
      %v822 = vld [vmem:[%s809 + $0x30] sm:$0xf]
      %v823 = vld [vmem:[%s809 + $0x34] sm:$0xf]
      %v824 = vld [vmem:[%s809 + $0x38] sm:$0xf]
      %v825 = vld [vmem:[%s809 + $0x3c] sm:$0xf]
      %s826 = scalar_lea.vmem %s328, 16
      %v827 = vld [vmem:[%s826] sm:$0xf]
      %v828 = vld [vmem:[%s826 + $0x4] sm:$0x3]
      %v845 = vunpack.c.l.b16 %v810
      %v846 = vunpack.c.l.b16 %v811
      %v847 = vunpack.c.l.b16 %v812
      %v848 = vunpack.c.l.b16 %v813
      %v849 = vunpack.c.l.b16 %v814
      %v850 = vunpack.c.l.b16 %v815
      %v851 = vunpack.c.l.b16 %v816
      %v852 = vunpack.c.l.b16 %v817
      %v853 = vunpack.c.l.b16 %v818
      %v854 = vunpack.c.l.b16 %v819
      %v855 = vunpack.c.l.b16 %v820
      %v856 = vunpack.c.l.b16 %v821
      %v857 = vunpack.c.l.b16 %v822
      %v858 = vunpack.c.l.b16 %v823
      %v859 = vunpack.c.l.b16 %v824
      %v860 = vunpack.c.l.b16 %v825
      %v861 = vpack.c.b16 %v846, %v845
      %v862 = vpack.c.b16 %v848, %v847
      %v863 = vpack.c.b16 %v850, %v849
      %v864 = vpack.c.b16 %v852, %v851
      %v865 = vpack.c.b16 %v854, %v853
      %v866 = vpack.c.b16 %v856, %v855
      %v867 = vpack.c.b16 %v858, %v857
      %v868 = vpack.c.b16 %v860, %v859
      %v871 = vunpack.c.l.b16 %v827
      %v872 = vunpack.c.l.b16 %v828
      %v873 = vpack.c.b16 %v872, %v871
      %v875 = vsel %vm430, %v861, 0
      %v878 = vsel %vm430, %v862, 0
      %v881 = vsel %vm430, %v863, 0
      %v884 = vsel %vm430, %v864, 0
      %v887 = vsel %vm430, %v865, 0
      %v890 = vsel %vm430, %v866, 0
      %v893 = vsel %vm430, %v867, 0
      %v896 = vsel %vm430, %v868, 0
      %v899 = vsel %vm455, %v873, 0
      %901 = vmatprep.subr.bf16.mxu0 0
      %902 = vmatpush1.bf16.msra.mxu0 0
      %903 = vmatprep.subr.bf16.mxu0 0
      %904 = vmatpush1.bf16.msra.mxu0 0
      %905 = vmatprep.subr.bf16.mxu0 0
      %906 = vmatpush1.bf16.msra.mxu0 0
      %907 = vmatprep.subr.bf16.mxu0 0
      %908 = vmatpush1.bf16.msra.mxu0 0
      %909 = vmatprep.subr.bf16.mxu0 0
      %910 = vmatpush1.bf16.msra.mxu0 0
      %911 = vmatprep.subr.bf16.mxu0 0
      %912 = vmatpush1.bf16.msra.mxu0 0
      %913 = vmatprep.subr.bf16.mxu0 0
      %914 = vmatpush1.bf16.msra.mxu0 0
      %915 = vmatprep.subr.bf16.mxu0 0
      %916 = vmatpush1.bf16.msra.mxu0 %v899
      %917 = vmatprep.subr.bf16.mxu0 0
      %918 = vmatpush2.bf16.msra.mxu0 0
      %919 = vmatprep.subr.bf16.mxu0 0
      %920 = vmatpush2.bf16.msra.mxu0 0
      %921 = vmatprep.subr.bf16.mxu0 0
      %922 = vmatpush2.bf16.msra.mxu0 0
      %923 = vmatprep.subr.bf16.mxu0 0
      %924 = vmatpush2.bf16.msra.mxu0 0
      %925 = vmatprep.subr.bf16.mxu0 0
      %926 = vmatpush2.bf16.msra.mxu0 0
      %927 = vmatprep.subr.bf16.mxu0 0
      %928 = vmatpush2.bf16.msra.mxu0 0
      %929 = vmatprep.subr.bf16.mxu0 0
      %930 = vmatpush2.bf16.msra.mxu0 0
      %931 = vmatprep.subr.bf16.mxu0 0
      %932 = vmatpush2.bf16.msra.mxu0 0
      %933 = vmatprep.mubr.bf16.mxu0 0
      %934 = vmatmul.mubr.bf16.gmra.mxu0 %v875
      %v935 = vpop.f32.mrf.mxu0
      %v936 = vadd.f32 0.0, %v935
      %v937 = vpop.f32.mrf.mxu0
      %v938 = vpop.f32.mrf.mxu0
      %v939 = vadd.f32 0.0, %v938
      %v940 = vpop.f32.mrf.mxu0
      %941 = vmatprep.mubr.bf16.mxu0 0
      %942 = vmatmul.mubr.bf16.gmra.mxu0 %v878
      %v943 = vpop.f32.mrf.mxu0
      %v944 = vadd.f32 0.0, %v943
      %v945 = vpop.f32.mrf.mxu0
      %v946 = vpop.f32.mrf.mxu0
      %v947 = vadd.f32 0.0, %v946
      %v948 = vpop.f32.mrf.mxu0
      %949 = vmatprep.mubr.bf16.mxu0 0
      %950 = vmatmul.mubr.bf16.gmra.mxu0 %v881
      %v951 = vpop.f32.mrf.mxu0
      %v952 = vadd.f32 0.0, %v951
      %v953 = vpop.f32.mrf.mxu0
      %v954 = vpop.f32.mrf.mxu0
      %v955 = vadd.f32 0.0, %v954
      %v956 = vpop.f32.mrf.mxu0
      %957 = vmatprep.mubr.bf16.mxu0 0
      %958 = vmatmul.mubr.bf16.gmra.mxu0 %v884
      %v959 = vpop.f32.mrf.mxu0
      %v960 = vadd.f32 0.0, %v959
      %v961 = vpop.f32.mrf.mxu0
      %v962 = vpop.f32.mrf.mxu0
      %v963 = vadd.f32 0.0, %v962
      %v964 = vpop.f32.mrf.mxu0
      %965 = vmatprep.mubr.bf16.mxu0 0
      %966 = vmatmul.mubr.bf16.gmra.mxu0 %v887
      %v967 = vpop.f32.mrf.mxu0
      %v968 = vadd.f32 0.0, %v967
      %v969 = vpop.f32.mrf.mxu0
      %v970 = vpop.f32.mrf.mxu0
      %v971 = vadd.f32 0.0, %v970
      %v972 = vpop.f32.mrf.mxu0
      %973 = vmatprep.mubr.bf16.mxu0 0
      %974 = vmatmul.mubr.bf16.gmra.mxu0 %v890
      %v975 = vpop.f32.mrf.mxu0
      %v976 = vadd.f32 0.0, %v975
      %v977 = vpop.f32.mrf.mxu0
      %v978 = vpop.f32.mrf.mxu0
      %v979 = vadd.f32 0.0, %v978
      %v980 = vpop.f32.mrf.mxu0
      %981 = vmatprep.mubr.bf16.mxu0 0
      %982 = vmatmul.mubr.bf16.gmra.mxu0 %v893
      %v983 = vpop.f32.mrf.mxu0
      %v984 = vadd.f32 0.0, %v983
      %v985 = vpop.f32.mrf.mxu0
      %v986 = vpop.f32.mrf.mxu0
      %v987 = vadd.f32 0.0, %v986
      %v988 = vpop.f32.mrf.mxu0
      %989 = vmatprep.mubr.bf16.mxu0 0
      %990 = vmatmul.mubr.bf16.gmra.mxu0 %v896
      %v991 = vpop.f32.mrf.mxu0
      %v992 = vadd.f32 0.0, %v991
      %v993 = vpop.f32.mrf.mxu0
      %v994 = vpop.f32.mrf.mxu0
      %v995 = vadd.f32 0.0, %v994
      %v996 = vpop.f32.mrf.mxu0
      %997 = vdwg.mxu0
      %v998 = vld [vmem:[#allocation2] sm:$0xff]
      %v999 = vld [vmem:[#allocation2 + $0x8] sm:$0xff]
      %v1000 = vld [vmem:[#allocation2 + $0x10] sm:$0xff]
      %v1001 = vld [vmem:[#allocation2 + $0x18] sm:$0xff]
      %v1002 = vld [vmem:[#allocation2 + $0x20] sm:$0xff]
      %v1003 = vld [vmem:[#allocation2 + $0x28] sm:$0xff]
      %v1004 = vld [vmem:[#allocation2 + $0x30] sm:$0xff]
      %v1005 = vld [vmem:[#allocation2 + $0x38] sm:$0xff]
      %v1006 = vld [vmem:[#allocation2 + $0x40] sm:$0xff]
      %v1007 = vld [vmem:[#allocation2 + $0x48] sm:$0xff]
      %v1008 = vld [vmem:[#allocation2 + $0x50] sm:$0xff]
      %v1009 = vld [vmem:[#allocation2 + $0x58] sm:$0xff]
      %v1010 = vld [vmem:[#allocation2 + $0x60] sm:$0xff]
      %v1011 = vld [vmem:[#allocation2 + $0x68] sm:$0xff]
      %v1012 = vld [vmem:[#allocation2 + $0x70] sm:$0xff]
      %v1013 = vld [vmem:[#allocation2 + $0x78] sm:$0xff]
      %v1014 = vadd.f32 %v998, %v936
      %v1015 = vadd.f32 %v999, %v939
      %v1016 = vadd.f32 %v1000, %v944
      %v1017 = vadd.f32 %v1001, %v947
      %v1018 = vadd.f32 %v1002, %v952
      %v1019 = vadd.f32 %v1003, %v955
      %v1020 = vadd.f32 %v1004, %v960
      %v1021 = vadd.f32 %v1005, %v963
      %v1022 = vadd.f32 %v1006, %v968
      %v1023 = vadd.f32 %v1007, %v971
      %v1024 = vadd.f32 %v1008, %v976
      %v1025 = vadd.f32 %v1009, %v979
      %v1026 = vadd.f32 %v1010, %v984
      %v1027 = vadd.f32 %v1011, %v987
      %v1028 = vadd.f32 %v1012, %v992
      %v1029 = vadd.f32 %v1013, %v995
      %1030 = vst [vmem:[#allocation2] sm:$0xff] %v1014
      %1031 = vst [vmem:[#allocation2 + $0x8] sm:$0xff] %v1015
      %1032 = vst [vmem:[#allocation2 + $0x10] sm:$0xff] %v1016
      %1033 = vst [vmem:[#allocation2 + $0x18] sm:$0xff] %v1017
      %1034 = vst [vmem:[#allocation2 + $0x20] sm:$0xff] %v1018
      %1035 = vst [vmem:[#allocation2 + $0x28] sm:$0xff] %v1019
      %1036 = vst [vmem:[#allocation2 + $0x30] sm:$0xff] %v1020
      %1037 = vst [vmem:[#allocation2 + $0x38] sm:$0xff] %v1021
      %1038 = vst [vmem:[#allocation2 + $0x40] sm:$0xff] %v1022
      %1039 = vst [vmem:[#allocation2 + $0x48] sm:$0xff] %v1023
      %1040 = vst [vmem:[#allocation2 + $0x50] sm:$0xff] %v1024
      %1041 = vst [vmem:[#allocation2 + $0x58] sm:$0xff] %v1025
      %1042 = vst [vmem:[#allocation2 + $0x60] sm:$0xff] %v1026
      %1043 = vst [vmem:[#allocation2 + $0x68] sm:$0xff] %v1027
      %1044 = vst [vmem:[#allocation2 + $0x70] sm:$0xff] %v1028
      %1045 = vst [vmem:[#allocation2 + $0x78] sm:$0xff] %v1029
      %v1046 = vld [vmem:[#allocation2] sm:$0xff]
      %v1047 = vld [vmem:[#allocation2 + $0x8] sm:$0xff]
      %v1048 = vld [vmem:[#allocation2 + $0x10] sm:$0xff]
      %v1049 = vld [vmem:[#allocation2 + $0x18] sm:$0xff]
      %v1050 = vld [vmem:[#allocation2 + $0x20] sm:$0xff]
      %v1051 = vld [vmem:[#allocation2 + $0x28] sm:$0xff]
      %v1052 = vld [vmem:[#allocation2 + $0x30] sm:$0xff]
      %v1053 = vld [vmem:[#allocation2 + $0x38] sm:$0xff]
      %v1054 = vld [vmem:[#allocation2 + $0x40] sm:$0xff]
      %v1055 = vld [vmem:[#allocation2 + $0x48] sm:$0xff]
      %v1056 = vld [vmem:[#allocation2 + $0x50] sm:$0xff]
      %v1057 = vld [vmem:[#allocation2 + $0x58] sm:$0xff]
      %v1058 = vld [vmem:[#allocation2 + $0x60] sm:$0xff]
      %v1059 = vld [vmem:[#allocation2 + $0x68] sm:$0xff]
      %v1060 = vld [vmem:[#allocation2 + $0x70] sm:$0xff]
      %v1061 = vld [vmem:[#allocation2 + $0x78] sm:$0xff]
      %v1062 = vpack.c.bf16 %v1047, %v1046
      %v1063 = vpack.c.bf16 %v1049, %v1048
      %v1064 = vpack.c.bf16 %v1051, %v1050
      %v1065 = vpack.c.bf16 %v1053, %v1052
      %v1066 = vpack.c.bf16 %v1055, %v1054
      %v1067 = vpack.c.bf16 %v1057, %v1056
      %v1068 = vpack.c.bf16 %v1059, %v1058
      %v1069 = vpack.c.bf16 %v1061, %v1060
      %v1078 = vunpack.c.l.b16 %v1062
      %v1079 = vunpack.c.h.b16 %v1062
      %v1080 = vunpack.c.l.b16 %v1063
      %v1081 = vunpack.c.h.b16 %v1063
      %v1082 = vunpack.c.l.b16 %v1064
      %v1083 = vunpack.c.h.b16 %v1064
      %v1084 = vunpack.c.l.b16 %v1065
      %v1085 = vunpack.c.h.b16 %v1065
      %v1086 = vunpack.c.l.b16 %v1066
      %v1087 = vunpack.c.h.b16 %v1066
      %v1088 = vunpack.c.l.b16 %v1067
      %v1089 = vunpack.c.h.b16 %v1067
      %v1090 = vunpack.c.l.b16 %v1068
      %v1091 = vunpack.c.h.b16 %v1068
      %v1092 = vunpack.c.l.b16 %v1069
      %v1093 = vunpack.c.h.b16 %v1069
      %v1094 = vpack.c.b16 %v1078, %v1078
      %v1095 = vpack.c.b16 %v1079, %v1079
      %v1096 = vpack.c.b16 %v1080, %v1080
      %v1097 = vpack.c.b16 %v1081, %v1081
      %v1098 = vpack.c.b16 %v1082, %v1082
      %v1099 = vpack.c.b16 %v1083, %v1083
      %v1100 = vpack.c.b16 %v1084, %v1084
      %v1101 = vpack.c.b16 %v1085, %v1085
      %v1102 = vpack.c.b16 %v1086, %v1086
      %v1103 = vpack.c.b16 %v1087, %v1087
      %v1104 = vpack.c.b16 %v1088, %v1088
      %v1105 = vpack.c.b16 %v1089, %v1089
      %v1106 = vpack.c.b16 %v1090, %v1090
      %v1107 = vpack.c.b16 %v1091, %v1091
      %v1108 = vpack.c.b16 %v1092, %v1092
      %v1109 = vpack.c.b16 %v1093, %v1093
      %1126 = vst [vmem:[%s345] sm:$0xf] %v1094
      %1127 = vst [vmem:[%s345 + $0x4] sm:$0xf] %v1095
      %1128 = vst [vmem:[%s345 + $0x8] sm:$0xf] %v1096
      %1129 = vst [vmem:[%s345 + $0xc] sm:$0xf] %v1097
      %1130 = vst [vmem:[%s345 + $0x10] sm:$0xf] %v1098
      %1131 = vst [vmem:[%s345 + $0x14] sm:$0xf] %v1099
      %1132 = vst [vmem:[%s345 + $0x18] sm:$0xf] %v1100
      %1133 = vst [vmem:[%s345 + $0x1c] sm:$0xf] %v1101
      %1134 = vst [vmem:[%s345 + $0x20] sm:$0xf] %v1102
      %1135 = vst [vmem:[%s345 + $0x24] sm:$0xf] %v1103
      %1136 = vst [vmem:[%s345 + $0x28] sm:$0xf] %v1104
      %1137 = vst [vmem:[%s345 + $0x2c] sm:$0xf] %v1105
      %1138 = vst [vmem:[%s345 + $0x30] sm:$0xf] %v1106
      %1139 = vst [vmem:[%s345 + $0x34] sm:$0xf] %v1107
      %1140 = vst [vmem:[%s345 + $0x38] sm:$0xf] %v1108
      %1141 = vst [vmem:[%s345 + $0x3c] sm:$0xf] %v1109
      %v1142 = vld [vmem:[%s333] sm:$0xff]
      %v1143 = vld [vmem:[%s333 + $0x8] sm:$0xff]
      %v1144 = vld [vmem:[%s333 + $0x10] sm:$0xff]
      %v1145 = vld [vmem:[%s333 + $0x18] sm:$0xff]
      %v1146 = vld [vmem:[%s333 + $0x20] sm:$0xff]
      %v1147 = vld [vmem:[%s333 + $0x28] sm:$0xff]
      %v1148 = vld [vmem:[%s333 + $0x30] sm:$0xff]
      %v1149 = vld [vmem:[%s333 + $0x38] sm:$0xff]
      %v1150 = vld [vmem:[%s333 + $0x40] sm:$0xff]
      %v1151 = vld [vmem:[%s333 + $0x48] sm:$0xff]
      %v1152 = vld [vmem:[%s333 + $0x50] sm:$0xff]
      %v1153 = vld [vmem:[%s333 + $0x58] sm:$0xff]
      %v1154 = vld [vmem:[%s333 + $0x60] sm:$0xff]
      %v1155 = vld [vmem:[%s333 + $0x68] sm:$0xff]
      %v1156 = vld [vmem:[%s333 + $0x70] sm:$0xff]
      %v1157 = vld [vmem:[%s333 + $0x78] sm:$0xff]
      %1159 = vset.pattern.permute.xlu0 0
      %1160 = vperm.xlu0 %1159, %v1142
      %v1161 = vpop.permute.xlu0 %1160
      %1164 = vset.pattern.permute.xlu0 0
      %1165 = vperm.xlu0 %1164, %v1143
      %v1166 = vpop.permute.xlu0 %1165
      %1169 = vset.pattern.permute.xlu0 0
      %1170 = vperm.xlu0 %1169, %v1144
      %v1171 = vpop.permute.xlu0 %1170
      %1174 = vset.pattern.permute.xlu0 0
      %1175 = vperm.xlu0 %1174, %v1145
      %v1176 = vpop.permute.xlu0 %1175
      %1179 = vset.pattern.permute.xlu0 0
      %1180 = vperm.xlu0 %1179, %v1146
      %v1181 = vpop.permute.xlu0 %1180
      %1184 = vset.pattern.permute.xlu0 0
      %1185 = vperm.xlu0 %1184, %v1147
      %v1186 = vpop.permute.xlu0 %1185
      %1189 = vset.pattern.permute.xlu0 0
      %1190 = vperm.xlu0 %1189, %v1148
      %v1191 = vpop.permute.xlu0 %1190
      %1194 = vset.pattern.permute.xlu0 0
      %1195 = vperm.xlu0 %1194, %v1149
      %v1196 = vpop.permute.xlu0 %1195
      %1199 = vset.pattern.permute.xlu0 0
      %1200 = vperm.xlu0 %1199, %v1150
      %v1201 = vpop.permute.xlu0 %1200
      %1204 = vset.pattern.permute.xlu0 0
      %1205 = vperm.xlu0 %1204, %v1151
      %v1206 = vpop.permute.xlu0 %1205
      %1209 = vset.pattern.permute.xlu0 0
      %1210 = vperm.xlu0 %1209, %v1152
      %v1211 = vpop.permute.xlu0 %1210
      %1214 = vset.pattern.permute.xlu0 0
      %1215 = vperm.xlu0 %1214, %v1153
      %v1216 = vpop.permute.xlu0 %1215
      %1219 = vset.pattern.permute.xlu0 0
      %1220 = vperm.xlu0 %1219, %v1154
      %v1221 = vpop.permute.xlu0 %1220
      %1224 = vset.pattern.permute.xlu0 0
      %1225 = vperm.xlu0 %1224, %v1155
      %v1226 = vpop.permute.xlu0 %1225
      %1229 = vset.pattern.permute.xlu0 0
      %1230 = vperm.xlu0 %1229, %v1156
      %v1231 = vpop.permute.xlu0 %1230
      %1234 = vset.pattern.permute.xlu0 0
      %1235 = vperm.xlu0 %1234, %v1157
      %v1236 = vpop.permute.xlu0 %1235
      %v1238 = vmul.f32 %v1046, %v1161
      %v1239 = vmul.f32 %v1047, %v1166
      %v1240 = vmul.f32 %v1048, %v1171
      %v1241 = vmul.f32 %v1049, %v1176
      %v1242 = vmul.f32 %v1050, %v1181
      %v1243 = vmul.f32 %v1051, %v1186
      %v1244 = vmul.f32 %v1052, %v1191
      %v1245 = vmul.f32 %v1053, %v1196
      %v1246 = vmul.f32 %v1054, %v1201
      %v1247 = vmul.f32 %v1055, %v1206
      %v1248 = vmul.f32 %v1056, %v1211
      %v1249 = vmul.f32 %v1057, %v1216
      %v1250 = vmul.f32 %v1058, %v1221
      %v1251 = vmul.f32 %v1059, %v1226
      %v1252 = vmul.f32 %v1060, %v1231
      %v1253 = vmul.f32 %v1061, %v1236
      %v1254 = vadd.f32 %v1238, %v1239
      %v1255 = vadd.f32 %v1254, %v1240
      %v1256 = vadd.f32 %v1255, %v1241
      %v1257 = vadd.f32 %v1256, %v1242
      %v1258 = vadd.f32 %v1257, %v1243
      %v1259 = vadd.f32 %v1258, %v1244
      %v1260 = vadd.f32 %v1259, %v1245
      %v1261 = vadd.f32 %v1260, %v1246
      %v1262 = vadd.f32 %v1261, %v1247
      %v1263 = vadd.f32 %v1262, %v1248
      %v1264 = vadd.f32 %v1263, %v1249
      %v1265 = vadd.f32 %v1264, %v1250
      %v1266 = vadd.f32 %v1265, %v1251
      %v1267 = vadd.f32 %v1266, %v1252
      %v1268 = vadd.f32 %v1267, %v1253
      %v1269 = vrot.slane %v1268, 4
      %v1270 = vadd.f32 %v1268, %v1269
      %v1271 = vrot.slane %v1270, 2
      %v1272 = vadd.f32 %v1270, %v1271
      %v1273 = vrot.slane %v1272, 1
      %v1274 = vadd.f32 %v1272, %v1273
      %1275 = vst [vmem:[%s355] sm:$0x1] %v1274
      %v1276 = vmul.f32 %v1238, %v1046
      %v1277 = vmul.f32 %v1239, %v1047
      %v1278 = vmul.f32 %v1240, %v1048
      %v1279 = vmul.f32 %v1241, %v1049
      %v1280 = vmul.f32 %v1242, %v1050
      %v1281 = vmul.f32 %v1243, %v1051
      %v1282 = vmul.f32 %v1244, %v1052
      %v1283 = vmul.f32 %v1245, %v1053
      %v1284 = vmul.f32 %v1246, %v1054
      %v1285 = vmul.f32 %v1247, %v1055
      %v1286 = vmul.f32 %v1248, %v1056
      %v1287 = vmul.f32 %v1249, %v1057
      %v1288 = vmul.f32 %v1250, %v1058
      %v1289 = vmul.f32 %v1251, %v1059
      %v1290 = vmul.f32 %v1252, %v1060
      %v1291 = vmul.f32 %v1253, %v1061
      %v1292 = vadd.f32 %v1276, %v1277
      %v1293 = vadd.f32 %v1292, %v1278
      %v1294 = vadd.f32 %v1293, %v1279
      %v1295 = vadd.f32 %v1294, %v1280
      %v1296 = vadd.f32 %v1295, %v1281
      %v1297 = vadd.f32 %v1296, %v1282
      %v1298 = vadd.f32 %v1297, %v1283
      %v1299 = vadd.f32 %v1298, %v1284
      %v1300 = vadd.f32 %v1299, %v1285
      %v1301 = vadd.f32 %v1300, %v1286
      %v1302 = vadd.f32 %v1301, %v1287
      %v1303 = vadd.f32 %v1302, %v1288
      %v1304 = vadd.f32 %v1303, %v1289
      %v1305 = vadd.f32 %v1304, %v1290
      %v1306 = vadd.f32 %v1305, %v1291
      %v1307 = vrot.slane %v1306, 4
      %v1308 = vadd.f32 %v1306, %v1307
      %v1309 = vrot.slane %v1308, 2
      %v1310 = vadd.f32 %v1308, %v1309
      %v1311 = vrot.slane %v1310, 1
      %v1312 = vadd.f32 %v1310, %v1311
      %1313 = vst [vmem:[%s365] sm:$0x1] %v1312
      %p1314 = scmp.lt.s32.totalorder %s22, 1
      %s1315 = scalar_select %p1314, %s22, 1
      %p1316 = scmp.lt.s32.totalorder %s23, 1
      %s1317 = scalar_select %p1316, %s23, 1
      %p1318 = scmp.lt.s32.totalorder %s24, 0
      %s1319 = scalar_select %p1318, %s24, 0
      %s1320 = smul.addr %s1317, 16
      %s1321 = sadd.s32 %s1319, %s1320
      %s1322 = smul.addr %s1315, 32
      %s1323 = sadd.s32 %s1321, %s1322
      %s1324 = smul.addr %s1323, 4
      %s1325 = scalar_lea.vmem %s3, %s1324
      %p1326 = scmp.lt.s32.totalorder %s22, 1
      %s1327 = scalar_select %p1326, %s22, 1
      %p1328 = scmp.lt.s32.totalorder %s23, 1
      %s1329 = scalar_select %p1328, %s23, 1
      %p1330 = scmp.lt.s32.totalorder %s24, 0
      %s1331 = scalar_select %p1330, %s24, 0
      %s1332 = sadd.s32 %s1331, %s1329
      %s1333 = smul.addr %s1327, 2
      %s1334 = sadd.s32 %s1332, %s1333
      %s1335 = scalar_lea.vmem %s4, %s1334
      %p1336 = scmp.lt.s32.totalorder %s22, 1
      %s1337 = scalar_select %p1336, %s22, 1
      %p1338 = scmp.lt.s32.totalorder %s23, 1
      %s1339 = scalar_select %p1338, %s23, 1
      %p1340 = scmp.lt.s32.totalorder %s24, 0
      %s1341 = scalar_select %p1340, %s24, 0
      %s1342 = sadd.s32 %s1341, %s1339
      %s1343 = smul.addr %s1337, 2
      %s1344 = sadd.s32 %s1342, %s1343
      %s1345 = scalar_lea.vmem %s5, %s1344
      // Predicated region
      $region33: #{yolo_block.2} parent=31 // pred_check
        %p1346 = pneg %p138
      $region34: #{yolo_block.2} parent=31 // pred_check_branch
        %1348 = sbr.rel (%p1346) target = $region36
      $region35: #{yolo_block.2} parent=31 // pred_region
        _
      $region36: #{yolo_block.2} parent=31 // pred_fallthru
        _
      // Predicated region
      $region37: #{yolo_block.2} parent=31 // pred_check
        %p1349 = pneg %p168
      $region38: #{yolo_block.2} parent=31 // pred_check_branch
        %1351 = sbr.rel (%p1349) target = $region40
      $region39: #{yolo_block.2} parent=31 // pred_region
        _
      $region40: #{yolo_block.2} parent=31 // pred_fallthru
        _
      // Predicated region
      $region41: #{yolo_block.2} parent=31 // pred_check
        %p1352 = pneg %p198
      $region42: #{yolo_block.2} parent=31 // pred_check_branch
        %1354 = sbr.rel (%p1352) target = $region44
      $region43: #{yolo_block.2} parent=31 // pred_region
        _
      $region44: #{yolo_block.2} parent=31 // pred_fallthru
        _
    $region32: #{yolo_block.2} parent=5 // pred_fallthru
      _
    %p1355 = scmp.le.s32.totalorder 2, %s12
    // Predicated region
    $region45: #{yolo_block.2} parent=5 // pred_check
      %p1356 = pneg %p1355
    $region46: #{yolo_block.2} parent=5 // pred_check_branch
      %1358 = sbr.rel (%p1356) target = $region48
    $region47: #{yolo_block.2} parent=5 // pred_region
      %s1359 = ssub.s32 %s12, 2
      // Predicated region
      $region49: #{yolo_block.2} parent=47 // pred_check
        %p1360 = pneg %p144
      $region50: #{yolo_block.2} parent=47 // pred_check_branch
        %1362 = sbr.rel (%p1360) target = $region52
      $region51: #{yolo_block.2} parent=47 // pred_region
        %p1363 = scmp.lt.s32.totalorder %s25, 1
        %s1364 = scalar_select %p1363, %s25, 1
        %p1365 = scmp.lt.s32.totalorder %s26, 1
        %s1366 = scalar_select %p1365, %s26, 1
        %p1367 = scmp.lt.s32.totalorder %s27, 0
        %s1368 = scalar_select %p1367, %s27, 0
        %s1369 = smul.addr %s1366, 16
        %s1370 = sadd.s32 %s1368, %s1369
        %s1371 = smul.addr %s1364, 32
        %s1372 = sadd.s32 %s1370, %s1371
        %s1373 = smul.addr %s1372, 4
        %s1374 = scalar_lea.vmem %s3, %s1373
      $region52: #{yolo_block.2} parent=47 // pred_fallthru
        _
      // Predicated region
      $region53: #{yolo_block.2} parent=47 // pred_check
        %p1375 = pneg %p174
      $region54: #{yolo_block.2} parent=47 // pred_check_branch
        %1377 = sbr.rel (%p1375) target = $region56
      $region55: #{yolo_block.2} parent=47 // pred_region
        %p1378 = scmp.lt.s32.totalorder %s25, 1
        %s1379 = scalar_select %p1378, %s25, 1
        %p1380 = scmp.lt.s32.totalorder %s26, 1
        %s1381 = scalar_select %p1380, %s26, 1
        %p1382 = scmp.lt.s32.totalorder %s27, 0
        %s1383 = scalar_select %p1382, %s27, 0
        %s1384 = sadd.s32 %s1383, %s1381
        %s1385 = smul.addr %s1379, 2
        %s1386 = sadd.s32 %s1384, %s1385
        %s1387 = scalar_lea.vmem %s4, %s1386
      $region56: #{yolo_block.2} parent=47 // pred_fallthru
        _
      // Predicated region
      $region57: #{yolo_block.2} parent=47 // pred_check
        %p1388 = pneg %p204
      $region58: #{yolo_block.2} parent=47 // pred_check_branch
        %1390 = sbr.rel (%p1388) target = $region60
      $region59: #{yolo_block.2} parent=47 // pred_region
        %p1391 = scmp.lt.s32.totalorder %s25, 1
        %s1392 = scalar_select %p1391, %s25, 1
        %p1393 = scmp.lt.s32.totalorder %s26, 1
        %s1394 = scalar_select %p1393, %s26, 1
        %p1395 = scmp.lt.s32.totalorder %s27, 0
        %s1396 = scalar_select %p1395, %s27, 0
        %s1397 = sadd.s32 %s1396, %s1394
        %s1398 = smul.addr %s1392, 2
        %s1399 = sadd.s32 %s1397, %s1398
        %s1400 = scalar_lea.vmem %s5, %s1399
      $region60: #{yolo_block.2} parent=47 // pred_fallthru
        _
    $region48: #{yolo_block.2} parent=5 // pred_fallthru
      _
  $region6: #{yolo_block.2} parent=0 // loop_footer
    %s16 = sadd.s32 1, %s12
  $region7: #{yolo_block.2} parent=0 // loop_footer_branch
    %11 = sbr.rel target = $region3
  $region8: #{yolo_block.2} parent=0 // loop_exit
    _

</llo_original>
